<compile_context>
chip_gen: v7x
topology: tpu7x:2x2x1
jax: 0.10.0
libtpu: 0.0.40
codegen_flags: <defaults>
</compile_context>

<pallas_src>
import functools
import math

import jax
import jax.numpy as jnp
from jax import lax
from jax.experimental import pallas as pl
from jax.experimental.pallas import tpu as pltpu


# ----------------------------------------------------------------------------
# Kernel 1: backbone stem -- Conv3x3(pad=1) as ONE K=9*Cin matmul per pixel
#           chunk, fused SiLU + global average pool.
#           grid = (batch, pixel_chunks); pool accumulator lives in VMEM.
# ----------------------------------------------------------------------------
def stem_kernel(patch_ref, wk_ref, b_ref, pooled_ref, acc_ref, *,
                hw, tm, inv_hw, need_mask):
    # patch_ref : (1, TM, Kp)  bf16  im2col'd pixels for this chunk (K in lanes)
    # wk_ref    : (Kp, Cf)     bf16  conv taps flattened to (9*Cin, Cf)
    # b_ref     : (1, Cf)      f32
    # pooled_ref: (1, 1, Cf)   f32   global average of SiLU(conv(x))
    # acc_ref   : (1, Cf)      f32   running pool sum (scratch)
    c = pl.program_id(1)

    @pl.when(c == 0)
    def _init():
        acc_ref[...] = jnp.zeros_like(acc_ref)

    x = patch_ref[0]                                    # (TM, Kp) bf16
    pre = jnp.dot(x, wk_ref[...],                       # single deep matmul
                  preferred_element_type=jnp.float32) + b_ref[...]
    pre_b = pre.astype(jnp.bfloat16)                    # bf16 VPU/EUP SiLU
    act = (pre_b * jax.nn.sigmoid(pre_b)).astype(jnp.float32)
    if need_mask:                                       # static: only if HW padded
        row = lax.broadcasted_iota(jnp.int32, act.shape, 0) + c * tm
        act = jnp.where(row < hw, act, 0.0)
    acc_ref[...] += jnp.sum(act, axis=0, keepdims=True)  # f32 pool accumulation

    @pl.when(c == pl.num_programs(1) - 1)
    def _finalize():
        pooled_ref[0] = acc_ref[...] * inv_hw


# ----------------------------------------------------------------------------
# Kernel 2: fused head -- fc, batchnorm, arc-margin, online-softmax partials.
#           grid = (core_split, class_tiles); split axis is "parallel" so v7x
#           runs the two class halves on its two TensorCores; per-split
#           (m, l, target) partials are merged in a tiny JAX epilogue.
# ----------------------------------------------------------------------------
def head_kernel(x_ref, wc_ref, bc_ref, g_ref, be_ref, wn_ref, label_ref,
                logits_ref, m_out, l_out, t_out,
                xn_sc, m_sc, l_sc, t_sc, *,
                bn_eps, cos_m, sin_m, th, mm, scale,
                n_classes, tile_n, tiles_per_split, b_real):
    i = pl.program_id(0)          # core split (class range)
    j = pl.program_id(1)          # class tile within split

    @pl.when(j == 0)
    def _init():
        # classifier: Linear(in_features, fc_dim); weight passed transposed,
        # bf16 operands, f32 accumulation.
        x = jnp.dot(x_ref[...], wc_ref[...],
                    preferred_element_type=jnp.float32) + bc_ref[...]

        # BatchNorm1d (training): batch statistics over the REAL rows only.
        bpad = x.shape[0]
        row = lax.broadcasted_iota(jnp.int32, (bpad, 1), 0)
        rmask = (row < b_real).astype(jnp.float32)
        inv_b = 1.0 / b_real
        mu = jnp.sum(x * rmask, axis=0, keepdims=True) * inv_b
        xc = (x - mu) * rmask
        var = jnp.sum(xc * xc, axis=0, keepdims=True) * inv_b
        xbn = g_ref[...] * (x - mu) * lax.rsqrt(var + bn_eps) + be_ref[...]

        # ArcFace input normalization; stash (bf16) for all class tiles.
        xn = xbn * lax.rsqrt(
            jnp.maximum(jnp.sum(xbn * xbn, axis=1, keepdims=True), 1e-24))
        xn_sc[...] = xn.astype(xn_sc.dtype)

        # online-softmax accumulators (f32)
        m_sc[...] = jnp.full_like(m_sc, -1e30)
        l_sc[...] = jnp.zeros_like(l_sc)
        t_sc[...] = jnp.zeros_like(t_sc)

    # ---- per class-tile arc-margin logits (wn_ref is pre-normalized W^T) ----
    cosine = jnp.dot(xn_sc[...], wn_ref[...],          # bf16 x bf16 -> f32
                     preferred_element_type=jnp.float32)
    sine = jnp.sqrt(jnp.maximum(1.0 - cosine * cosine, 0.0))
    phi = cosine * cos_m - sine * sin_m
    phi = jnp.where(cosine > th, phi, cosine - mm)      # easy_margin=False

    tile_idx = i * tiles_per_split + j
    col = lax.broadcasted_iota(jnp.int32, cosine.shape, 1) + tile_idx * tile_n
    one_hot = (col == label_ref[...]).astype(jnp.float32)   # ls_eps = 0.0
    out = (one_hot * phi + (1.0 - one_hot) * cosine) * scale
    logits_ref[...] = out

    # ---- online softmax over this split's class tiles (f32) ----------------
    out_m = jnp.where(col < n_classes, out, -1e30)      # drop padded classes
    m_new = jnp.maximum(m_sc[...], jnp.max(out_m, axis=1, keepdims=True))
    alpha = jnp.exp(m_sc[...] - m_new)
    l_new = l_sc[...] * alpha + jnp.sum(jnp.exp(out_m - m_new),
                                        axis=1, keepdims=True)
    t_new = t_sc[...] + jnp.sum(one_hot * out, axis=1, keepdims=True)
    m_sc[...] = m_new
    l_sc[...] = l_new
    t_sc[...] = t_new

    # per-split partials (tiny) written every step -> merged in the wrapper
    m_out[...] = m_new
    l_out[...] = l_new
    t_out[...] = t_new


# ----------------------------------------------------------------------------
# JAX glue
# ----------------------------------------------------------------------------
def _round_up(x, m):
    return (x + m - 1) // m * m


def init_params(key, cin, backbone_features, fc_dim, n_classes):
    k = jax.random.split(key, 3)
    cf = backbone_features
    return {
        # backbone stem conv (PyTorch layout: Cout, Cin, kh, kw)
        "conv_w": 0.1 * jax.random.normal(k[0], (cf, cin, 3, 3), jnp.float32),
        "conv_b": jnp.zeros((cf,), jnp.float32),
        # classifier (xavier_normal-like), bias = 0
        "cls_w": jax.random.normal(k[1], (fc_dim, cf), jnp.float32)
                 * math.sqrt(2.0 / (fc_dim + cf)),
        "cls_b": jnp.zeros((fc_dim,), jnp.float32),
        # BatchNorm1d: weight=1, bias=0
        "bn_g": jnp.ones((fc_dim,), jnp.float32),
        "bn_b": jnp.zeros((fc_dim,), jnp.float32),
        # ArcMargin weight (xavier_uniform-like), shape (n_classes, fc_dim)
        "arc_w": jax.random.uniform(
            k[2], (n_classes, fc_dim), jnp.float32,
            -math.sqrt(6.0 / (n_classes + fc_dim)),
            math.sqrt(6.0 / (n_classes + fc_dim))),
    }


@functools.partial(jax.jit, static_argnames=("n_classes", "margin", "scale"))
def shopee_forward(params, image, label, dropout_key, *, n_classes,
                   margin=0.5, scale=30.0):
    B, Cin, H, W = image.shape
    Cf = params["conv_w"].shape[0]
    fc_dim = params["cls_w"].shape[0]

    # ------------- backbone stem: conv3x3 + SiLU + global avg pool ----------
    # im2col in the wrapper: (B, H*W, 9*Cin), K in the lane dim -> the stem
    # kernel is a single deep matmul per pixel chunk with grid-bounded VMEM.
    K = 9 * Cin
    Kp = _round_up(K, 8)                       # sublane-aligned contraction
    HW = H * W
    TM = 512 if HW >= 512 else _round_up(HW, 8)   # pixel-chunk rows (mult of 8)
    HW_pad = _round_up(HW, TM)
    n_chunks = HW_pad // TM

    x_nhwc = jnp.transpose(image, (0, 2, 3, 1))
    xpad = jnp.pad(x_nhwc, ((0, 0), (1, 1), (1, 1), (0, 0))).astype(jnp.bfloat16)
    slabs = [xpad[:, di:di + H, dj:dj + W, :]
             for di in range(3) for dj in range(3)]
    patches = jnp.concatenate(slabs, axis=-1).reshape(B, HW, K)
    patches = jnp.pad(patches, ((0, 0), (0, HW_pad - HW), (0, Kp - K)))

    # conv taps flattened in matching (di, dj, ci) order, bf16.
    wk = jnp.transpose(params["conv_w"], (2, 3, 1, 0)).reshape(K, Cf)
    wk = jnp.pad(wk, ((0, Kp - K), (0, 0))).astype(jnp.bfloat16)
    b2 = params["conv_b"].reshape(1, Cf)

    stem_cost = pl.CostEstimate(
        flops=int(2 * B * HW_pad * Kp * Cf),
        transcendentals=int(B * HW_pad * Cf),
        bytes_accessed=int(patches.size * 2 + wk.size * 2
                           + b2.size * 4 + B * Cf * 4))

    pooled = pl.pallas_call(
        functools.partial(stem_kernel, hw=HW, tm=TM, inv_hw=1.0 / HW,
                          need_mask=(HW_pad != HW)),
        out_shape=jax.ShapeDtypeStruct((B, 1, Cf), jnp.float32),
        grid=(B, n_chunks),
        in_specs=[
            pl.BlockSpec((1, TM, Kp), lambda b, c: (b, c, 0)),   # pixel chunk
            pl.BlockSpec((Kp, Cf), lambda b, c: (0, 0)),         # conv taps
            pl.BlockSpec((1, Cf), lambda b, c: (0, 0)),          # bias
        ],
        out_specs=pl.BlockSpec((1, 1, Cf), lambda b, c: (b, 0, 0)),
        scratch_shapes=[pltpu.VMEM((1, Cf), jnp.float32)],       # pool sum
        compiler_params=pltpu.CompilerParams(
            dimension_semantics=("parallel", "arbitrary"),       # batch // TCs
            vmem_limit_bytes=32 * 1024 * 1024),
        cost_estimate=stem_cost,
    )(patches, wk, b2)
    pooled = pooled.reshape(B, Cf)

    # ------------------------- fused metric-learning head -------------------
    B_pad = _round_up(max(B, 8), 8)            # >= 8 sublanes for matmuls
    TN = 256                                    # class tile (sweep 256-512)
    N_SPLIT = 2                                 # v7x: one class half per TC
    C_pad = _round_up(n_classes, TN * N_SPLIT)
    tiles_per_split = C_pad // (TN * N_SPLIT)

    # Dropout(p=0.1), training mode, drawn on the REAL rows in the wrapper
    # (the in-kernel TPU PRNG has no CPU-interpret lowering).
    p_drop = 0.1
    keep = jax.random.bernoulli(dropout_key, 1.0 - p_drop, (B, Cf))
    pooled_drop = jnp.where(keep, pooled * (1.0 / (1.0 - p_drop)), 0.0)
    x_in = jnp.pad(pooled_drop, ((0, B_pad - B), (0, 0))).astype(jnp.bfloat16)

    label_pad = jnp.pad(label.astype(jnp.int32), (0, B_pad - B),
                        constant_values=-1).reshape(B_pad, 1)

    # Pre-normalize ArcFace weights once (hoisted), transpose, pad classes to
    # a multiple of TN*N_SPLIT, and stream them in bf16 (halves HBM traffic).
    aw = params["arc_w"]
    aw_n = aw * lax.rsqrt(
        jnp.maximum(jnp.sum(aw * aw, axis=1, keepdims=True), 1e-24))
    wn_t = jnp.pad(aw_n.T, ((0, 0), (0, C_pad - n_classes))).astype(jnp.bfloat16)

    cls_wt = params["cls_w"].T.astype(jnp.bfloat16)        # (Cf, fc_dim)

    head_cost = pl.CostEstimate(
        flops=int(N_SPLIT * 2 * B_pad * Cf * fc_dim + 2 * B_pad * fc_dim * C_pad),
        transcendentals=int(2 * B_pad * C_pad),
        bytes_accessed=int(x_in.size * 2 + cls_wt.size * 2 + 3 * fc_dim * 4
                           + wn_t.size * 2 + label_pad.size * 4
                           + B_pad * C_pad * 4 + 3 * N_SPLIT * B_pad * 4))

    kern = functools.partial(
        head_kernel,
        bn_eps=1e-5,
        cos_m=math.cos(margin), sin_m=math.sin(margin),
        th=math.cos(math.pi - margin), mm=math.sin(math.pi - margin) * margin,
        scale=scale, n_classes=n_classes, tile_n=TN,
        tiles_per_split=tiles_per_split, b_real=B)

    logits_pad, m_part, l_part, t_part = pl.pallas_call(
        kern,
        out_shape=(jax.ShapeDtypeStruct((B_pad, C_pad), jnp.float32),
                   jax.ShapeDtypeStruct((N_SPLIT, B_pad, 1), jnp.float32),
                   jax.ShapeDtypeStruct((N_SPLIT, B_pad, 1), jnp.float32),
                   jax.ShapeDtypeStruct((N_SPLIT, B_pad, 1), jnp.float32)),
        grid=(N_SPLIT, tiles_per_split),
        in_specs=[
            pl.BlockSpec((B_pad, Cf), lambda i, j: (0, 0)),        # pooled+drop
            pl.BlockSpec((Cf, fc_dim), lambda i, j: (0, 0)),       # cls W^T
            pl.BlockSpec((1, fc_dim), lambda i, j: (0, 0)),        # cls bias
            pl.BlockSpec((1, fc_dim), lambda i, j: (0, 0)),        # bn gamma
            pl.BlockSpec((1, fc_dim), lambda i, j: (0, 0)),        # bn beta
            pl.BlockSpec((fc_dim, TN),                             # arc W^T tile
                         lambda i, j: (0, i * tiles_per_split + j)),
            pl.BlockSpec((B_pad, 1), lambda i, j: (0, 0)),         # labels
        ],
        out_specs=(pl.BlockSpec((B_pad, TN),
                                lambda i, j: (0, i * tiles_per_split + j)),
                   pl.BlockSpec((None, B_pad, 1), lambda i, j: (i, 0, 0)),
                   pl.BlockSpec((None, B_pad, 1), lambda i, j: (i, 0, 0)),
                   pl.BlockSpec((None, B_pad, 1), lambda i, j: (i, 0, 0))),
        scratch_shapes=[
            pltpu.VMEM((B_pad, fc_dim), jnp.bfloat16),  # normalized features
            pltpu.VMEM((B_pad, 1), jnp.float32),        # running max
            pltpu.VMEM((B_pad, 1), jnp.float32),        # running sum-exp
            pltpu.VMEM((B_pad, 1), jnp.float32),        # target logit
        ],
        compiler_params=pltpu.CompilerParams(
            dimension_semantics=("parallel", "arbitrary"),
            vmem_limit_bytes=32 * 1024 * 1024),
        cost_estimate=head_cost,
    )(x_in, cls_wt, params["cls_b"].reshape(1, fc_dim),
      params["bn_g"].reshape(1, fc_dim), params["bn_b"].reshape(1, fc_dim),
      wn_t, label_pad)

    # Tiny epilogue: merge the per-split online-softmax partials into the CE
    # loss (mean over the real batch rows).  Fully-padded splits carry
    # m = -1e30, so exp(m_part - m) zeroes their contribution.
    m_all = jnp.max(m_part, axis=0)                           # (B_pad, 1)
    l_all = jnp.sum(jnp.exp(m_part - m_all) * l_part, axis=0)
    lse = m_all + jnp.log(l_all)
    tgt = jnp.sum(t_part, axis=0)
    loss = jnp.mean(lse[:B, 0] - tgt[:B, 0])

    return logits_pad[:B, :n_classes], loss


if __name__ == "__main__":
    B, Cin, H, W = 2, 3, 16, 16
    Cf, FC_DIM, N_CLASSES = 128, 128, 200   # 200 classes -> 512 padded cols

    key = jax.random.PRNGKey(0)
    k_img, k_lbl, k_par, k_drop = jax.random.split(key, 4)

    image = jax.random.normal(k_img, (B, Cin, H, W), jnp.float32)
    label = jax.random.randint(k_lbl, (B,), 0, N_CLASSES, jnp.int32)

    params = init_params(k_par, Cin, Cf, FC_DIM, N_CLASSES)

    logits, loss = shopee_forward(params, image, label, k_drop,
                                  n_classes=N_CLASSES, margin=0.5, scale=30.0)
    jax.block_until_ready((logits, loss))

    assert logits.shape == (B, N_CLASSES)
    assert loss.shape == ()
    assert bool(jnp.isfinite(loss)) and bool(jnp.all(jnp.isfinite(logits)))
    print("KERNEL_OK")
</pallas_src>

<mosaic_0001>
module attributes {stable_mosaic.version = 11 : i64} {
  func.func @stem_kernel(%arg0: i32, %arg1: i32, %arg2: memref<1x256x32xbf16, #tpu.memory_space<vmem>>, %arg3: memref<32x128xbf16, #tpu.memory_space<vmem>>, %arg4: memref<1x128xf32, #tpu.memory_space<vmem>>, %arg5: memref<1x1x128xf32, #tpu.memory_space<vmem>>, %arg6: memref<1x128xf32, #tpu.memory_space<vmem>>) attributes {dimension_semantics = [#tpu.dimension_semantics<parallel>, #tpu.dimension_semantics<arbitrary>], iteration_bounds = array<i64: 2, 1>, scalar_prefetch = 0 : i64, scratch_operands = 1 : i64, tpu.core_type = #tpu.core_type<tc>, window_params = [{transform_indices = @transform_0, window_bounds = array<i64: 1, 256, 32>}, {pipeline_mode = #tpu.pipeline_mode<synchronous>, transform_indices = @transform_1, window_bounds = array<i64: 32, 128>}, {pipeline_mode = #tpu.pipeline_mode<synchronous>, transform_indices = @transform_2, window_bounds = array<i64: 1, 128>}, {transform_indices = @transform_3, window_bounds = array<i64: 1, 1, 128>}]} {
    %c0_i32 = arith.constant 0 : i32
    %0 = arith.cmpi eq, %arg1, %c0_i32 : i32
    %1 = arith.extui %0 : i1 to i32
    %c0_i32_0 = arith.constant 0 : i32
    %2 = arith.cmpi ne, %1, %c0_i32_0 : i32
    scf.if %2 {
      %cst_15 = arith.constant 0.000000e+00 : f32
      %26 = vector.broadcast %cst_15 : f32 to vector<1x128xf32>
      %c0_16 = arith.constant 0 : index
      %c0_17 = arith.constant 0 : index
      %27 = vector.load %arg6[%c0_16, %c0_17] : memref<1x128xf32, #tpu.memory_space<vmem>>, vector<1x128xf32>
      tpu.vector_store %arg6[%c0_16, %c0_17], %26 {strides = array<i32>} : memref<1x128xf32, #tpu.memory_space<vmem>>, vector<1x128xf32>,
    } else {
    }
    %c0 = arith.constant 0 : index
    %c0_1 = arith.constant 0 : index
    %c0_2 = arith.constant 0 : index
    %3 = vector.load %arg2[%c0, %c0_1, %c0_2] : memref<1x256x32xbf16, #tpu.memory_space<vmem>>, vector<1x256x32xbf16>
    %4 = vector.shape_cast %3 : vector<1x256x32xbf16> to vector<256x32xbf16>
    %c0_3 = arith.constant 0 : index
    %c0_4 = arith.constant 0 : index
    %5 = vector.load %arg3[%c0_3, %c0_4] : memref<32x128xbf16, #tpu.memory_space<vmem>>, vector<32x128xbf16>
    %cst = arith.constant dense<0.000000e+00> : vector<256x128xf32>
    %6 = tpu.matmul %4, %5, %cst {dimension_numbers = #tpu.dot_dimension_numbers<[1], [0], [0], [1], [0, 0, 1, 1], [], []>} : vector<256x32xbf16>, vector<32x128xbf16>, vector<256x128xf32> -> vector<256x128xf32>
    %c0_5 = arith.constant 0 : index
    %c0_6 = arith.constant 0 : index
    %7 = vector.load %arg4[%c0_5, %c0_6] : memref<1x128xf32, #tpu.memory_space<vmem>>, vector<1x128xf32>
    %8 = vector.broadcast %7 : vector<1x128xf32> to vector<256x128xf32>
    %9 = arith.addf %6, %8 : vector<256x128xf32>
    %10 = arith.truncf %9 : vector<256x128xf32> to vector<256x128xbf16>
    %11 = arith.negf %10 : vector<256x128xbf16>
    %12 = math.exp %11 : vector<256x128xbf16>
    %cst_7 = arith.constant 1.000000e+00 : bf16
    %13 = vector.broadcast %cst_7 : bf16 to vector<256x128xbf16>
    %14 = arith.addf %13, %12 : vector<256x128xbf16>
    %15 = arith.divf %13, %14 : vector<256x128xbf16>
    %16 = arith.mulf %10, %15 : vector<256x128xbf16>
    %17 = arith.extf %16 : vector<256x128xbf16> to vector<256x128xf32>
    %c0_8 = arith.constant 0 : index
    %c0_9 = arith.constant 0 : index
    %18 = vector.load %arg6[%c0_8, %c0_9] : memref<1x128xf32, #tpu.memory_space<vmem>>, vector<1x128xf32>
    %cst_10 = arith.constant dense<0.000000e+00> : vector<128xf32>
    %19 = vector.multi_reduction <add>, %17, %cst_10 [0] : vector<256x128xf32> to vector<128xf32>
    %20 = vector.shape_cast %19 : vector<128xf32> to vector<1x128xf32>
    %21 = arith.addf %18, %20 : vector<1x128xf32>
    %c0_11 = arith.constant 0 : index
    %c0_12 = arith.constant 0 : index
    %22 = vector.load %arg6[%c0_11, %c0_12] : memref<1x128xf32, #tpu.memory_space<vmem>>, vector<1x128xf32>
    tpu.vector_store %arg6[%c0_11, %c0_12], %21 {strides = array<i32>} : memref<1x128xf32, #tpu.memory_space<vmem>>, vector<1x128xf32>,
    %c0_i32_13 = arith.constant 0 : i32
    %23 = arith.cmpi eq, %arg1, %c0_i32_13 : i32
    %24 = arith.extui %23 : i1 to i32
    %c0_i32_14 = arith.constant 0 : i32
    %25 = arith.cmpi ne, %24, %c0_i32_14 : i32
    scf.if %25 {
      %c0_15 = arith.constant 0 : index
      %c0_16 = arith.constant 0 : index
      %26 = vector.load %arg6[%c0_15, %c0_16] : memref<1x128xf32, #tpu.memory_space<vmem>>, vector<1x128xf32>
      %cst_17 = arith.constant 3.906250e-03 : f32
      %27 = vector.broadcast %cst_17 : f32 to vector<1x128xf32>
      %28 = arith.mulf %26, %27 : vector<1x128xf32>
      %c0_18 = arith.constant 0 : index
      %c0_19 = arith.constant 0 : index
      %c0_20 = arith.constant 0 : index
      %29 = vector.load %arg5[%c0_18, %c0_19, %c0_20] : memref<1x1x128xf32, #tpu.memory_space<vmem>>, vector<1x1x128xf32>
      %30 = vector.shape_cast %29 : vector<1x1x128xf32> to vector<1x128xf32>
      %31 = vector.shape_cast %28 : vector<1x128xf32> to vector<1x1x128xf32>
      tpu.vector_store %arg5[%c0_18, %c0_19, %c0_20], %31 {strides = array<i32>} : memref<1x1x128xf32, #tpu.memory_space<vmem>>, vector<1x1x128xf32>,
    } else {
    }
    return
  }
  func.func @transform_0(%arg0: i32, %arg1: i32) -> (i32, i32, i32) {
    %c0_i32 = arith.constant 0 : i32
    %c0_i32_0 = arith.constant 0 : i32
    return %arg0, %arg1, %c0_i32 : i32, i32, i32
  }
  func.func @transform_1(%arg0: i32, %arg1: i32) -> (i32, i32) {
    %c0_i32 = arith.constant 0 : i32
    %c0_i32_0 = arith.constant 0 : i32
    %c0_i32_1 = arith.constant 0 : i32
    return %c0_i32, %c0_i32_0 : i32, i32
  }
  func.func @transform_2(%arg0: i32, %arg1: i32) -> (i32, i32) {
    %c0_i32 = arith.constant 0 : i32
    %c0_i32_0 = arith.constant 0 : i32
    %c0_i32_1 = arith.constant 0 : i32
    return %c0_i32, %c0_i32_0 : i32, i32
  }
  func.func @transform_3(%arg0: i32, %arg1: i32) -> (i32, i32, i32) {
    %c0_i32 = arith.constant 0 : i32
    %c0_i32_0 = arith.constant 0 : i32
    %c0_i32_1 = arith.constant 0 : i32
    return %arg0, %c0_i32, %c0_i32_0 : i32, i32, i32
  }
}

module attributes {stable_mosaic.version = 11 : i64} {
  func.func @head_kernel(%arg0: i32, %arg1: i32, %arg2: memref<8x128xbf16, #tpu.memory_space<vmem>>, %arg3: memref<128x128xbf16, #tpu.memory_space<vmem>>, %arg4: memref<1x128xf32, #tpu.memory_space<vmem>>, %arg5: memref<1x128xf32, #tpu.memory_space<vmem>>, %arg6: memref<1x128xf32, #tpu.memory_space<vmem>>, %arg7: memref<128x256xbf16, #tpu.memory_space<vmem>>, %arg8: memref<8x1xi32, #tpu.memory_space<vmem>>, %arg9: memref<8x256xf32, #tpu.memory_space<vmem>>, %arg10: memref<1x8x1xf32, #tpu.memory_space<vmem>>, %arg11: memref<1x8x1xf32, #tpu.memory_space<vmem>>, %arg12: memref<1x8x1xf32, #tpu.memory_space<vmem>>, %arg13: memref<8x128xbf16, #tpu.memory_space<vmem>>, %arg14: memref<8x1xf32, #tpu.memory_space<vmem>>, %arg15: memref<8x1xf32, #tpu.memory_space<vmem>>, %arg16: memref<8x1xf32, #tpu.memory_space<vmem>>) attributes {dimension_semantics = [#tpu.dimension_semantics<parallel>, #tpu.dimension_semantics<arbitrary>], iteration_bounds = array<i64: 2, 1>, scalar_prefetch = 0 : i64, scratch_operands = 4 : i64, tpu.core_type = #tpu.core_type<tc>, window_params = [{pipeline_mode = #tpu.pipeline_mode<synchronous>, transform_indices = @transform_0, window_bounds = array<i64: 8, 128>}, {pipeline_mode = #tpu.pipeline_mode<synchronous>, transform_indices = @transform_1, window_bounds = array<i64: 128, 128>}, {pipeline_mode = #tpu.pipeline_mode<synchronous>, transform_indices = @transform_2, window_bounds = array<i64: 1, 128>}, {pipeline_mode = #tpu.pipeline_mode<synchronous>, transform_indices = @transform_3, window_bounds = array<i64: 1, 128>}, {pipeline_mode = #tpu.pipeline_mode<synchronous>, transform_indices = @transform_4, window_bounds = array<i64: 1, 128>}, {transform_indices = @transform_5, window_bounds = array<i64: 128, 256>}, {pipeline_mode = #tpu.pipeline_mode<synchronous>, transform_indices = @transform_6, window_bounds = array<i64: 8, 1>}, {transform_indices = @transform_7, window_bounds = array<i64: 8, 256>}, {transform_indices = @transform_8, window_bounds = array<i64: 1, 8, 1>}, {transform_indices = @transform_9, window_bounds = array<i64: 1, 8, 1>}, {transform_indices = @transform_10, window_bounds = array<i64: 1, 8, 1>}]} {
    %c0_i32 = arith.constant 0 : i32
    %0 = arith.cmpi eq, %arg1, %c0_i32 : i32
    %1 = arith.extui %0 : i1 to i32
    %c0_i32_0 = arith.constant 0 : i32
    %2 = arith.cmpi ne, %1, %c0_i32_0 : i32
    scf.if %2 {
      %c0_43 = arith.constant 0 : index
      %c0_44 = arith.constant 0 : index
      %77 = vector.load %arg2[%c0_43, %c0_44] : memref<8x128xbf16, #tpu.memory_space<vmem>>, vector<8x128xbf16>
      %c0_45 = arith.constant 0 : index
      %c0_46 = arith.constant 0 : index
      %78 = vector.load %arg3[%c0_45, %c0_46] : memref<128x128xbf16, #tpu.memory_space<vmem>>, vector<128x128xbf16>
      %cst_47 = arith.constant dense<0.000000e+00> : vector<8x128xf32>
      %79 = tpu.matmul %77, %78, %cst_47 {dimension_numbers = #tpu.dot_dimension_numbers<[1], [0], [0], [1], [0, 0, 1, 1], [], []>} : vector<8x128xbf16>, vector<128x128xbf16>, vector<8x128xf32> -> vector<8x128xf32>
      %c0_48 = arith.constant 0 : index
      %c0_49 = arith.constant 0 : index
      %80 = vector.load %arg4[%c0_48, %c0_49] : memref<1x128xf32, #tpu.memory_space<vmem>>, vector<1x128xf32>
      %81 = vector.broadcast %80 : vector<1x128xf32> to vector<8x128xf32>
      %82 = arith.addf %79, %81 : vector<8x128xf32>
      %83 = tpu.iota {dimensions = array<i32: 0>} : vector<8x1xi32>
      %c2_i32 = arith.constant 2 : i32
      %84 = vector.broadcast %c2_i32 : i32 to vector<8x1xi32>
      %85 = arith.cmpi slt, %83, %84 : vector<8x1xi32>
      %86 = arith.extui %85 : vector<8x1xi1> to vector<8x1xi32>
      %87 = arith.sitofp %86 : vector<8x1xi32> to vector<8x1xf32>
      %88 = vector.broadcast %87 : vector<8x1xf32> to vector<8x128xf32>
      %89 = arith.mulf %82, %88 : vector<8x128xf32>
      %cst_50 = arith.constant dense<0.000000e+00> : vector<128xf32>
      %90 = vector.multi_reduction <add>, %89, %cst_50 [0] : vector<8x128xf32> to vector<128xf32>
      %91 = vector.shape_cast %90 : vector<128xf32> to vector<1x128xf32>
      %cst_51 = arith.constant 5.000000e-01 : f32
      %92 = vector.broadcast %cst_51 : f32 to vector<1x128xf32>
      %93 = arith.mulf %91, %92 : vector<1x128xf32>
      %94 = vector.broadcast %93 : vector<1x128xf32> to vector<8x128xf32>
      %95 = arith.subf %82, %94 : vector<8x128xf32>
      %96 = vector.broadcast %87 : vector<8x1xf32> to vector<8x128xf32>
      %97 = arith.mulf %95, %96 : vector<8x128xf32>
      %98 = arith.mulf %97, %97 : vector<8x128xf32>
      %cst_52 = arith.constant dense<0.000000e+00> : vector<128xf32>
      %99 = vector.multi_reduction <add>, %98, %cst_52 [0] : vector<8x128xf32> to vector<128xf32>
      %100 = vector.shape_cast %99 : vector<128xf32> to vector<1x128xf32>
      %cst_53 = arith.constant 5.000000e-01 : f32
      %101 = vector.broadcast %cst_53 : f32 to vector<1x128xf32>
      %102 = arith.mulf %100, %101 : vector<1x128xf32>
      %c0_54 = arith.constant 0 : index
      %c0_55 = arith.constant 0 : index
      %103 = vector.load %arg5[%c0_54, %c0_55] : memref<1x128xf32, #tpu.memory_space<vmem>>, vector<1x128xf32>
      %104 = vector.broadcast %93 : vector<1x128xf32> to vector<8x128xf32>
      %105 = arith.subf %82, %104 : vector<8x128xf32>
      %106 = vector.broadcast %103 : vector<1x128xf32> to vector<8x128xf32>
      %107 = arith.mulf %106, %105 : vector<8x128xf32>
      %cst_56 = arith.constant 9.99999974E-6 : f32
      %108 = vector.broadcast %cst_56 : f32 to vector<1x128xf32>
      %109 = arith.addf %102, %108 : vector<1x128xf32>
      %110 = math.rsqrt %109 : vector<1x128xf32>
      %111 = vector.broadcast %110 : vector<1x128xf32> to vector<8x128xf32>
      %112 = arith.mulf %107, %111 : vector<8x128xf32>
      %c0_57 = arith.constant 0 : index
      %c0_58 = arith.constant 0 : index
      %113 = vector.load %arg6[%c0_57, %c0_58] : memref<1x128xf32, #tpu.memory_space<vmem>>, vector<1x128xf32>
      %114 = vector.broadcast %113 : vector<1x128xf32> to vector<8x128xf32>
      %115 = arith.addf %112, %114 : vector<8x128xf32>
      %116 = arith.mulf %115, %115 : vector<8x128xf32>
      %cst_59 = arith.constant dense<0.000000e+00> : vector<8xf32>
      %117 = vector.multi_reduction <add>, %116, %cst_59 [1] : vector<8x128xf32> to vector<8xf32>
      %118 = vector.shape_cast %117 : vector<8xf32> to vector<8x1xf32>
      %cst_60 = arith.constant 1.000000e-24 : f32
      %119 = vector.broadcast %cst_60 : f32 to vector<8x1xf32>
      %120 = arith.maximumf %118, %119 : vector<8x1xf32>
      %121 = math.rsqrt %120 : vector<8x1xf32>
      %122 = vector.broadcast %121 : vector<8x1xf32> to vector<8x128xf32>
      %123 = arith.mulf %115, %122 : vector<8x128xf32>
      %124 = arith.truncf %123 : vector<8x128xf32> to vector<8x128xbf16>
      %c0_61 = arith.constant 0 : index
      %c0_62 = arith.constant 0 : index
      %125 = vector.load %arg13[%c0_61, %c0_62] : memref<8x128xbf16, #tpu.memory_space<vmem>>, vector<8x128xbf16>
      tpu.vector_store %arg13[%c0_61, %c0_62], %124 {strides = array<i32>} : memref<8x128xbf16, #tpu.memory_space<vmem>>, vector<8x128xbf16>,
      %cst_63 = arith.constant -1.000000e+30 : f32
      %126 = vector.broadcast %cst_63 : f32 to vector<8x1xf32>
      %c0_64 = arith.constant 0 : index
      %c0_65 = arith.constant 0 : index
      %127 = vector.load %arg14[%c0_64, %c0_65] : memref<8x1xf32, #tpu.memory_space<vmem>>, vector<8x1xf32>
      tpu.vector_store %arg14[%c0_64, %c0_65], %126 {strides = array<i32>} : memref<8x1xf32, #tpu.memory_space<vmem>>, vector<8x1xf32>,
      %cst_66 = arith.constant 0.000000e+00 : f32
      %128 = vector.broadcast %cst_66 : f32 to vector<8x1xf32>
      %c0_67 = arith.constant 0 : index
      %c0_68 = arith.constant 0 : index
      %129 = vector.load %arg15[%c0_67, %c0_68] : memref<8x1xf32, #tpu.memory_space<vmem>>, vector<8x1xf32>
      tpu.vector_store %arg15[%c0_67, %c0_68], %128 {strides = array<i32>} : memref<8x1xf32, #tpu.memory_space<vmem>>, vector<8x1xf32>,
      %cst_69 = arith.constant 0.000000e+00 : f32
      %130 = vector.broadcast %cst_69 : f32 to vector<8x1xf32>
      %c0_70 = arith.constant 0 : index
      %c0_71 = arith.constant 0 : index
      %131 = vector.load %arg16[%c0_70, %c0_71] : memref<8x1xf32, #tpu.memory_space<vmem>>, vector<8x1xf32>
      tpu.vector_store %arg16[%c0_70, %c0_71], %130 {strides = array<i32>} : memref<8x1xf32, #tpu.memory_space<vmem>>, vector<8x1xf32>,
    } else {
    }
    %c0 = arith.constant 0 : index
    %c0_1 = arith.constant 0 : index
    %3 = vector.load %arg13[%c0, %c0_1] : memref<8x128xbf16, #tpu.memory_space<vmem>>, vector<8x128xbf16>
    %c0_2 = arith.constant 0 : index
    %c0_3 = arith.constant 0 : index
    %4 = vector.load %arg7[%c0_2, %c0_3] : memref<128x256xbf16, #tpu.memory_space<vmem>>, vector<128x256xbf16>
    %cst = arith.constant dense<0.000000e+00> : vector<8x256xf32>
    %5 = tpu.matmul %3, %4, %cst {dimension_numbers = #tpu.dot_dimension_numbers<[1], [0], [0], [1], [0, 0, 1, 1], [], []>} : vector<8x128xbf16>, vector<128x256xbf16>, vector<8x256xf32> -> vector<8x256xf32>
    %6 = arith.mulf %5, %5 : vector<8x256xf32>
    %cst_4 = arith.constant 1.000000e+00 : f32
    %7 = vector.broadcast %cst_4 : f32 to vector<8x256xf32>
    %8 = arith.subf %7, %6 : vector<8x256xf32>
    %cst_5 = arith.constant 0.000000e+00 : f32
    %9 = vector.broadcast %cst_5 : f32 to vector<8x256xf32>
    %10 = arith.maximumf %8, %9 : vector<8x256xf32>
    %11 = math.sqrt %10 : vector<8x256xf32>
    %cst_6 = arith.constant 0.87758255 : f32
    %12 = vector.broadcast %cst_6 : f32 to vector<8x256xf32>
    %13 = arith.mulf %5, %12 : vector<8x256xf32>
    %cst_7 = arith.constant 0.47942555 : f32
    %14 = vector.broadcast %cst_7 : f32 to vector<8x256xf32>
    %15 = arith.mulf %11, %14 : vector<8x256xf32>
    %16 = arith.subf %13, %15 : vector<8x256xf32>
    %cst_8 = arith.constant -0.87758255 : f32
    %17 = vector.broadcast %cst_8 : f32 to vector<8x256xf32>
    %18 = arith.cmpf ogt, %5, %17 : vector<8x256xf32>
    %cst_9 = arith.constant 0.239712775 : f32
    %19 = vector.broadcast %cst_9 : f32 to vector<8x256xf32>
    %20 = arith.subf %5, %19 : vector<8x256xf32>
    %21 = arith.select %18, %16, %20 : vector<8x256xi1>, vector<8x256xf32>
    %c1_i32 = arith.constant 1 : i32
    %22 = arith.muli %arg0, %c1_i32 : i32
    %23 = arith.addi %22, %arg1 : i32
    %24 = tpu.iota {dimensions = array<i32: 1>} : vector<8x256xi32>
    %c256_i32 = arith.constant 256 : i32
    %25 = arith.muli %23, %c256_i32 : i32
    %26 = vector.broadcast %25 : i32 to vector<8x256xi32>
    %27 = arith.addi %24, %26 : vector<8x256xi32>
    %c0_10 = arith.constant 0 : index
    %c0_11 = arith.constant 0 : index
    %28 = vector.load %arg8[%c0_10, %c0_11] : memref<8x1xi32, #tpu.memory_space<vmem>>, vector<8x1xi32>
    %29 = vector.broadcast %28 : vector<8x1xi32> to vector<8x256xi32>
    %30 = arith.cmpi eq, %27, %29 : vector<8x256xi32>
    %31 = arith.extui %30 : vector<8x256xi1> to vector<8x256xi32>
    %32 = arith.sitofp %31 : vector<8x256xi32> to vector<8x256xf32>
    %33 = arith.mulf %32, %21 : vector<8x256xf32>
    %cst_12 = arith.constant 1.000000e+00 : f32
    %34 = vector.broadcast %cst_12 : f32 to vector<8x256xf32>
    %35 = arith.subf %34, %32 : vector<8x256xf32>
    %36 = arith.mulf %35, %5 : vector<8x256xf32>
    %37 = arith.addf %33, %36 : vector<8x256xf32>
    %cst_13 = arith.constant 3.000000e+01 : f32
    %38 = vector.broadcast %cst_13 : f32 to vector<8x256xf32>
    %39 = arith.mulf %37, %38 : vector<8x256xf32>
    %c0_14 = arith.constant 0 : index
    %c0_15 = arith.constant 0 : index
    %40 = vector.load %arg9[%c0_14, %c0_15] : memref<8x256xf32, #tpu.memory_space<vmem>>, vector<8x256xf32>
    tpu.vector_store %arg9[%c0_14, %c0_15], %39 {strides = array<i32>} : memref<8x256xf32, #tpu.memory_space<vmem>>, vector<8x256xf32>,
    %c200_i32 = arith.constant 200 : i32
    %41 = vector.broadcast %c200_i32 : i32 to vector<8x256xi32>
    %42 = arith.cmpi slt, %27, %41 : vector<8x256xi32>
    %cst_16 = arith.constant -1.000000e+30 : f32
    %43 = vector.broadcast %cst_16 : f32 to vector<8x256xf32>
    %44 = arith.select %42, %39, %43 : vector<8x256xi1>, vector<8x256xf32>
    %c0_17 = arith.constant 0 : index
    %c0_18 = arith.constant 0 : index
    %45 = vector.load %arg14[%c0_17, %c0_18] : memref<8x1xf32, #tpu.memory_space<vmem>>, vector<8x1xf32>
    %cst_19 = arith.constant dense<0xFF800000> : vector<8xf32>
    %46 = vector.multi_reduction <maximumf>, %44, %cst_19 [1] : vector<8x256xf32> to vector<8xf32>
    %47 = vector.shape_cast %46 : vector<8xf32> to vector<8x1xf32>
    %48 = arith.maximumf %45, %47 : vector<8x1xf32>
    %c0_20 = arith.constant 0 : index
    %c0_21 = arith.constant 0 : index
    %49 = vector.load %arg14[%c0_20, %c0_21] : memref<8x1xf32, #tpu.memory_space<vmem>>, vector<8x1xf32>
    %50 = arith.subf %49, %48 : vector<8x1xf32>
    %51 = math.exp %50 : vector<8x1xf32>
    %c0_22 = arith.constant 0 : index
    %c0_23 = arith.constant 0 : index
    %52 = vector.load %arg15[%c0_22, %c0_23] : memref<8x1xf32, #tpu.memory_space<vmem>>, vector<8x1xf32>
    %53 = arith.mulf %52, %51 : vector<8x1xf32>
    %54 = vector.broadcast %48 : vector<8x1xf32> to vector<8x256xf32>
    %55 = arith.subf %44, %54 : vector<8x256xf32>
    %56 = math.exp %55 : vector<8x256xf32>
    %cst_24 = arith.constant dense<0.000000e+00> : vector<8xf32>
    %57 = vector.multi_reduction <add>, %56, %cst_24 [1] : vector<8x256xf32> to vector<8xf32>
    %58 = vector.shape_cast %57 : vector<8xf32> to vector<8x1xf32>
    %59 = arith.addf %53, %58 : vector<8x1xf32>
    %c0_25 = arith.constant 0 : index
    %c0_26 = arith.constant 0 : index
    %60 = vector.load %arg16[%c0_25, %c0_26] : memref<8x1xf32, #tpu.memory_space<vmem>>, vector<8x1xf32>
    %61 = arith.mulf %32, %39 : vector<8x256xf32>
    %cst_27 = arith.constant dense<0.000000e+00> : vector<8xf32>
    %62 = vector.multi_reduction <add>, %61, %cst_27 [1] : vector<8x256xf32> to vector<8xf32>
    %63 = vector.shape_cast %62 : vector<8xf32> to vector<8x1xf32>
    %64 = arith.addf %60, %63 : vector<8x1xf32>
    %c0_28 = arith.constant 0 : index
    %c0_29 = arith.constant 0 : index
    %65 = vector.load %arg14[%c0_28, %c0_29] : memref<8x1xf32, #tpu.memory_space<vmem>>, vector<8x1xf32>
    tpu.vector_store %arg14[%c0_28, %c0_29], %48 {strides = array<i32>} : memref<8x1xf32, #tpu.memory_space<vmem>>, vector<8x1xf32>,
    %c0_30 = arith.constant 0 : index
    %c0_31 = arith.constant 0 : index
    %66 = vector.load %arg15[%c0_30, %c0_31] : memref<8x1xf32, #tpu.memory_space<vmem>>, vector<8x1xf32>
    tpu.vector_store %arg15[%c0_30, %c0_31], %59 {strides = array<i32>} : memref<8x1xf32, #tpu.memory_space<vmem>>, vector<8x1xf32>,
    %c0_32 = arith.constant 0 : index
    %c0_33 = arith.constant 0 : index
    %67 = vector.load %arg16[%c0_32, %c0_33] : memref<8x1xf32, #tpu.memory_space<vmem>>, vector<8x1xf32>
    tpu.vector_store %arg16[%c0_32, %c0_33], %64 {strides = array<i32>} : memref<8x1xf32, #tpu.memory_space<vmem>>, vector<8x1xf32>,
    %c0_34 = arith.constant 0 : index
    %c0_35 = arith.constant 0 : index
    %c0_36 = arith.constant 0 : index
    %68 = vector.load %arg10[%c0_34, %c0_35, %c0_36] : memref<1x8x1xf32, #tpu.memory_space<vmem>>, vector<1x8x1xf32>
    %69 = vector.shape_cast %68 : vector<1x8x1xf32> to vector<8x1xf32>
    %70 = vector.shape_cast %48 : vector<8x1xf32> to vector<1x8x1xf32>
    tpu.vector_store %arg10[%c0_34, %c0_35, %c0_36], %70 {strides = array<i32>} : memref<1x8x1xf32, #tpu.memory_space<vmem>>, vector<1x8x1xf32>,
    %c0_37 = arith.constant 0 : index
    %c0_38 = arith.constant 0 : index
    %c0_39 = arith.constant 0 : index
    %71 = vector.load %arg11[%c0_37, %c0_38, %c0_39] : memref<1x8x1xf32, #tpu.memory_space<vmem>>, vector<1x8x1xf32>
    %72 = vector.shape_cast %71 : vector<1x8x1xf32> to vector<8x1xf32>
    %73 = vector.shape_cast %59 : vector<8x1xf32> to vector<1x8x1xf32>
    tpu.vector_store %arg11[%c0_37, %c0_38, %c0_39], %73 {strides = array<i32>} : memref<1x8x1xf32, #tpu.memory_space<vmem>>, vector<1x8x1xf32>,
    %c0_40 = arith.constant 0 : index
    %c0_41 = arith.constant 0 : index
    %c0_42 = arith.constant 0 : index
    %74 = vector.load %arg12[%c0_40, %c0_41, %c0_42] : memref<1x8x1xf32, #tpu.memory_space<vmem>>, vector<1x8x1xf32>
    %75 = vector.shape_cast %74 : vector<1x8x1xf32> to vector<8x1xf32>
    %76 = vector.shape_cast %64 : vector<8x1xf32> to vector<1x8x1xf32>
    tpu.vector_store %arg12[%c0_40, %c0_41, %c0_42], %76 {strides = array<i32>} : memref<1x8x1xf32, #tpu.memory_space<vmem>>, vector<1x8x1xf32>,
    return
  }
  func.func @transform_0(%arg0: i32, %arg1: i32) -> (i32, i32) {
    %c0_i32 = arith.constant 0 : i32
    %c0_i32_0 = arith.constant 0 : i32
    %c0_i32_1 = arith.constant 0 : i32
    return %c0_i32, %c0_i32_0 : i32, i32
  }
  func.func @transform_1(%arg0: i32, %arg1: i32) -> (i32, i32) {
    %c0_i32 = arith.constant 0 : i32
    %c0_i32_0 = arith.constant 0 : i32
    %c0_i32_1 = arith.constant 0 : i32
    return %c0_i32, %c0_i32_0 : i32, i32
  }
  func.func @transform_2(%arg0: i32, %arg1: i32) -> (i32, i32) {
    %c0_i32 = arith.constant 0 : i32
    %c0_i32_0 = arith.constant 0 : i32
    %c0_i32_1 = arith.constant 0 : i32
    return %c0_i32, %c0_i32_0 : i32, i32
  }
  func.func @transform_3(%arg0: i32, %arg1: i32) -> (i32, i32) {
    %c0_i32 = arith.constant 0 : i32
    %c0_i32_0 = arith.constant 0 : i32
    %c0_i32_1 = arith.constant 0 : i32
    return %c0_i32, %c0_i32_0 : i32, i32
  }
  func.func @transform_4(%arg0: i32, %arg1: i32) -> (i32, i32) {
    %c0_i32 = arith.constant 0 : i32
    %c0_i32_0 = arith.constant 0 : i32
    %c0_i32_1 = arith.constant 0 : i32
    return %c0_i32, %c0_i32_0 : i32, i32
  }
  func.func @transform_5(%arg0: i32, %arg1: i32) -> (i32, i32) {
    %c1_i32 = arith.constant 1 : i32
    %0 = arith.muli %arg0, %c1_i32 : i32
    %1 = arith.addi %0, %arg1 : i32
    %c0_i32 = arith.constant 0 : i32
    %c0_i32_0 = arith.constant 0 : i32
    return %c0_i32, %1 : i32, i32
  }
  func.func @transform_6(%arg0: i32, %arg1: i32) -> (i32, i32) {
    %c0_i32 = arith.constant 0 : i32
    %c0_i32_0 = arith.constant 0 : i32
    %c0_i32_1 = arith.constant 0 : i32
    return %c0_i32, %c0_i32_0 : i32, i32
  }
  func.func @transform_7(%arg0: i32, %arg1: i32) -> (i32, i32) {
    %c1_i32 = arith.constant 1 : i32
    %0 = arith.muli %arg0, %c1_i32 : i32
    %1 = arith.addi %0, %arg1 : i32
    %c0_i32 = arith.constant 0 : i32
    %c0_i32_0 = arith.constant 0 : i32
    return %c0_i32, %1 : i32, i32
  }
  func.func @transform_8(%arg0: i32, %arg1: i32) -> (i32, i32, i32) {
    %c0_i32 = arith.constant 0 : i32
    %c0_i32_0 = arith.constant 0 : i32
    %c0_i32_1 = arith.constant 0 : i32
    return %arg0, %c0_i32, %c0_i32_0 : i32, i32, i32
  }
  func.func @transform_9(%arg0: i32, %arg1: i32) -> (i32, i32, i32) {
    %c0_i32 = arith.constant 0 : i32
    %c0_i32_0 = arith.constant 0 : i32
    %c0_i32_1 = arith.constant 0 : i32
    return %arg0, %c0_i32, %c0_i32_0 : i32, i32, i32
  }
  func.func @transform_10(%arg0: i32, %arg1: i32) -> (i32, i32, i32) {
    %c0_i32 = arith.constant 0 : i32
    %c0_i32_0 = arith.constant 0 : i32
    %c0_i32_1 = arith.constant 0 : i32
    return %arg0, %c0_i32, %c0_i32_0 : i32, i32, i32
  }
}

</mosaic_0001>

<llo_original>
// kernel: shopee_forward.2
$region0: #{shopee_forward.2}
  #allocation0 [shape = 'u32[]', space=smem, size = 0x4, offset = 0x4, fixed_abs, tag = 'smem constant byte address 0x4 - core index']
  #allocation1 [shape = 'u32[144,128]{1,0:T(1,128)}', space=vmem, size = 0x12000, scoped, tag = 'internal scratch']
  #allocation2 [shape = 'f32[1,128]{1,0:T(1,128)}', space=vmem, size = 0x200, scoped, tag = 'scratch operand']
  %s0 = inlined_call_operand.vmem [shape: bf16[2,256,32], index: 0, kind: input, shape index: {}]
  %s1 = inlined_call_operand.vmem [shape: bf16[32,128], index: 1, kind: input, shape index: {}]
  %s2 = inlined_call_operand.vmem [shape: f32[1,128], index: 2, kind: input, shape index: {}]
  %s3 = inlined_call_operand.vmem [shape: f32[2,1,128], index: 3, kind: output, shape index: {}]
  %s4 = sld [smem:[#allocation0]]
  $region53: #{shopee_forward.2} parent=0
    _
  %s6 = ssub.s32 1, %s4
  %s7 = scalar_select 0, %s6, %s4
  loop: start=0, step=1, limit=4
  $region2: #{shopee_forward.2} parent=0 // loop_pre_header
    _
  $region3: #{shopee_forward.2} parent=0 // loop_header
    %s9 = sphi 0, %s13
    %p10 = scmp.ge.s32.totalorder %s9, 4
    %s16 = sphi 0, %s28
    %s17 = sphi 0, %s24
    %s18 = sphi 0, %s16
    %s19 = sphi 0, %s17
    %s20 = sphi 0, %s18
    %s21 = sphi 0, %s19
    %s33 = sphi 0, %s35
    %s36 = sphi 0, %s33
    %s37 = sphi 0, %s36
    %s53 = sphi 0, %s37
    %s57 = sphi 0, %s57
    %s59 = sphi 0, %s57
    %s60 = sphi 0, %s59
    %s74 = sphi 0, %s60
    %s78 = sphi 0, %s78
    %s80 = sphi 0, %s78
    %s81 = sphi 0, %s80
    %s95 = sphi 0, %s81
    %s101 = sphi 0, %s103
    %s104 = sphi 0, %s101
    %s105 = sphi 0, %s104
    %s121 = sphi 0, %s105
  $region4: #{shopee_forward.2} parent=0 // loop_header_branch
    %12 = sbr.rel (%p10) target = $region8
  $region5: #{shopee_forward.2} parent=0 // loop_body
    %s14 = ssub.s32 %s9, 1
    %s15 = ssub.s32 %s9, 2
    %s22 = sadd.s32 1, %s17
    %p23 = scmp.ge.s32.totalorder %s22, 1
    %s24 = scalar_select %p23, 0, %s22
    %s25 = sadd.s32 1, %s16
    %s26 = scalar_select %p23, %s25, %s16
    %p27 = scmp.ge.s32.totalorder %s26, 2
    %s28 = scalar_select %p27, 0, %s26
    %s29 = ssub.s32 %s16, %s28
    %s30 = ssub.s32 %s17, %s24
    %s31 = sor.u32 %s29, %s30
    %p32 = scmp.eq.s32.totalorder %s31, 0
    %s34 = sadd.s32 %s33, 1
    %s35 = scalar_select %p32, %s33, %s34
    %p38 = pneg %p32
    %p39 = scmp.eq.s32.totalorder %s9, 1
    %p40 = por %p38, %p39
    %p41 = scmp.ne.s32.totalorder %s33, %s36
    %p42 = scmp.eq.s32.totalorder %s9, 0
    %p43 = por %p41, %p42
    %p44 = scmp.ne.s32.totalorder %s33, %s36
    %p45 = scmp.eq.s32.totalorder %s14, 1
    %p46 = por %p44, %p45
    %p47 = scmp.ne.s32.totalorder %s36, %s37
    %p48 = scmp.eq.s32.totalorder %s14, 0
    %p49 = por %p47, %p48
    %p50 = scmp.ne.s32.totalorder %s36, %s37
    %p51 = scmp.eq.s32.totalorder %s15, 1
    %p52 = por %p50, %p51
    %p54 = scmp.ne.s32.totalorder %s37, %s53
    %p55 = scmp.eq.s32.totalorder %s15, 0
    %p56 = por %p54, %p55
    %s58 = sadd.s32 %s57, 1
    %p61 = scmp.eq.s32.totalorder %s9, 1
    %p62 = scmp.ne.s32.totalorder %s57, %s59
    %p63 = scmp.eq.s32.totalorder %s9, 0
    %p64 = por %p62, %p63
    %p65 = scmp.ne.s32.totalorder %s57, %s59
    %p66 = scmp.eq.s32.totalorder %s14, 1
    %p67 = por %p65, %p66
    %p68 = scmp.ne.s32.totalorder %s59, %s60
    %p69 = scmp.eq.s32.totalorder %s14, 0
    %p70 = por %p68, %p69
    %p71 = scmp.ne.s32.totalorder %s59, %s60
    %p72 = scmp.eq.s32.totalorder %s15, 1
    %p73 = por %p71, %p72
    %p75 = scmp.ne.s32.totalorder %s60, %s74
    %p76 = scmp.eq.s32.totalorder %s15, 0
    %p77 = por %p75, %p76
    %s79 = sadd.s32 %s78, 1
    %p82 = scmp.eq.s32.totalorder %s9, 1
    %p83 = scmp.ne.s32.totalorder %s78, %s80
    %p84 = scmp.eq.s32.totalorder %s9, 0
    %p85 = por %p83, %p84
    %p86 = scmp.ne.s32.totalorder %s78, %s80
    %p87 = scmp.eq.s32.totalorder %s14, 1
    %p88 = por %p86, %p87
    %p89 = scmp.ne.s32.totalorder %s80, %s81
    %p90 = scmp.eq.s32.totalorder %s14, 0
    %p91 = por %p89, %p90
    %p92 = scmp.ne.s32.totalorder %s80, %s81
    %p93 = scmp.eq.s32.totalorder %s15, 1
    %p94 = por %p92, %p93
    %p96 = scmp.ne.s32.totalorder %s81, %s95
    %p97 = scmp.eq.s32.totalorder %s15, 0
    %p98 = por %p96, %p97
    %s99 = ssub.s32 %s16, %s28
    %p100 = scmp.eq.s32.totalorder %s99, 0
    %s102 = sadd.s32 %s101, 1
    %s103 = scalar_select %p100, %s101, %s102
    %p106 = pneg %p100
    %p107 = scmp.eq.s32.totalorder %s9, 1
    %p108 = por %p106, %p107
    %p109 = scmp.ne.s32.totalorder %s101, %s104
    %p110 = scmp.eq.s32.totalorder %s9, 0
    %p111 = por %p109, %p110
    %p112 = scmp.ne.s32.totalorder %s101, %s104
    %p113 = scmp.eq.s32.totalorder %s14, 1
    %p114 = por %p112, %p113
    %p115 = scmp.ne.s32.totalorder %s104, %s105
    %p116 = scmp.eq.s32.totalorder %s14, 0
    %p117 = por %p115, %p116
    %p118 = scmp.ne.s32.totalorder %s104, %s105
    %p119 = scmp.eq.s32.totalorder %s15, 1
    %p120 = por %p118, %p119
    %p122 = scmp.ne.s32.totalorder %s105, %s121
    %p123 = scmp.eq.s32.totalorder %s15, 0
    %p124 = por %p122, %p123
    %p125 = scmp.le.s32.totalorder 1, %s9
    %p126 = scmp.lt.s32.totalorder %s9, 3
    %p127 = pnand %p125, %p126
    %p128 = pneg %p127
    // Predicated region
    $region9: #{shopee_forward.2} parent=5 // pred_check
      _
    $region10: #{shopee_forward.2} parent=5 // pred_check_branch
      %130 = sbr.rel (%p127) target = $region12
    $region11: #{shopee_forward.2} parent=5 // pred_region
      %s131 = ssub.s32 %s9, 1
      // Predicated region
      $region13: #{shopee_forward.2} parent=11 // pred_check
        %p132 = pneg %p70
      $region14: #{shopee_forward.2} parent=11 // pred_check_branch
        %134 = sbr.rel (%p132) target = $region16
      $region15: #{shopee_forward.2} parent=11 // pred_region
        _
      $region16: #{shopee_forward.2} parent=11 // pred_fallthru
        _
      // Predicated region
      $region17: #{shopee_forward.2} parent=11 // pred_check
        %p135 = pneg %p91
      $region18: #{shopee_forward.2} parent=11 // pred_check_branch
        %137 = sbr.rel (%p135) target = $region20
      $region19: #{shopee_forward.2} parent=11 // pred_region
        _
      $region20: #{shopee_forward.2} parent=11 // pred_fallthru
        _
    $region12: #{shopee_forward.2} parent=5 // pred_fallthru
      _
    %p138 = scmp.lt.s32.totalorder %s9, 2
    // Predicated region
    $region21: #{shopee_forward.2} parent=5 // pred_check
      %p139 = pneg %p138
    $region22: #{shopee_forward.2} parent=5 // pred_check_branch
      %141 = sbr.rel (%p139) target = $region24
    $region23: #{shopee_forward.2} parent=5 // pred_region
      // Predicated region
      $region25: #{shopee_forward.2} parent=23 // pred_check
        %p142 = pneg %p43
      $region26: #{shopee_forward.2} parent=23 // pred_check_branch
        %144 = sbr.rel (%p142) target = $region28
      $region27: #{shopee_forward.2} parent=23 // pred_region
        %s145 = smul.u32 32, %s17
        %p146 = scmp.lt.s32.totalorder %s16, 1
        %s147 = scalar_select %p146, %s16, 1
        %p148 = scmp.lt.s32.totalorder %s145, 31
        %s149 = scalar_select %p148, %s145, 31
        %s150 = smul.addr %s147, 32
        %s151 = sadd.s32 %s149, %s150
        %s152 = smul.addr %s151, 4
        %s153 = scalar_lea.vmem %s0, %s152
        %s154 = smul.u32 32, %s17
      $region28: #{shopee_forward.2} parent=23 // pred_fallthru
        _
    $region24: #{shopee_forward.2} parent=5 // pred_fallthru
      _
    %p155 = scmp.le.s32.totalorder 1, %s9
    %p156 = scmp.lt.s32.totalorder %s9, 3
    %p157 = pnand %p155, %p156
    %p158 = pneg %p157
    // Predicated region
    $region29: #{shopee_forward.2} parent=5 // pred_check
      _
    $region30: #{shopee_forward.2} parent=5 // pred_check_branch
      %160 = sbr.rel (%p157) target = $region32
    $region31: #{shopee_forward.2} parent=5 // pred_region
      %s161 = ssub.s32 %s9, 1
      %s162 = smul.u32 32, %s19
      %p163 = scmp.lt.s32.totalorder %s18, 1
      %s164 = scalar_select %p163, %s18, 1
      %p165 = scmp.lt.s32.totalorder %s162, 31
      %s166 = scalar_select %p165, %s162, 31
      %s167 = smul.addr %s164, 32
      %s168 = sadd.s32 %s166, %s167
      %s169 = smul.addr %s168, 4
      %s170 = scalar_lea.vmem %s0, %s169
      %p171 = pneg %p49
      %p172 = pneg %p46
      %p173 = pneg %p70
      %p174 = pneg %p67
      %p175 = pneg %p91
      %p176 = pneg %p88
      %p177 = pneg %p117
      %p178 = pneg %p114
      %p179 = scmp.lt.s32.totalorder %s18, 1
      %s180 = scalar_select %p179, %s18, 1
      %s181 = scalar_lea.vmem %s3, %s180
      %s182 = smul.u32 32, %s19
      %p183 = scmp.lt.s32.totalorder %s18, 1
      %s184 = scalar_select %p183, %s18, 1
      %p185 = scmp.lt.s32.totalorder %s182, 31
      %s186 = scalar_select %p185, %s182, 31
      %s187 = smul.addr %s184, 32
      %s188 = sadd.s32 %s186, %s187
      %s189 = smul.addr %s188, 4
      %s190 = scalar_lea.vmem %s0, %s189
      %s191 = smul.u32 32, %s19
      %p192 = scmp.lt.s32.totalorder %s18, 1
      %s193 = scalar_select %p192, %s18, 1
      %s194 = scalar_lea.vmem %s3, %s193
      %p197 = scmp.eq.s32.totalorder %s19, 0
      // Predicated region
      $region33: #{shopee_forward.2} parent=31 // pred_check
        %p198 = pneg %p197
      $region34: #{shopee_forward.2} parent=31 // pred_check_branch
        %200 = sbr.rel (%p198) target = $region36
      $region35: #{shopee_forward.2} parent=31 // pred_region
        %201 = vst [vmem:[#allocation2] sm:$0x1] 0.0
      $region36: #{shopee_forward.2} parent=31 // pred_fallthru
        _
      %v202 = vld [vmem:[%s190] sm:$0xf]
      %v203 = vld [vmem:[%s190 + $0x4] sm:$0xf]
      %v204 = vld [vmem:[%s190 + $0x8] sm:$0xf]
      %v205 = vld [vmem:[%s190 + $0xc] sm:$0xf]
      %v206 = vld [vmem:[%s190 + $0x10] sm:$0xf]
      %v207 = vld [vmem:[%s190 + $0x14] sm:$0xf]
      %v208 = vld [vmem:[%s190 + $0x18] sm:$0xf]
      %v209 = vld [vmem:[%s190 + $0x1c] sm:$0xf]
      %v210 = vld [vmem:[%s190 + $0x20] sm:$0xf]
      %v211 = vld [vmem:[%s190 + $0x24] sm:$0xf]
      %v212 = vld [vmem:[%s190 + $0x28] sm:$0xf]
      %v213 = vld [vmem:[%s190 + $0x2c] sm:$0xf]
      %v214 = vld [vmem:[%s190 + $0x30] sm:$0xf]
      %v215 = vld [vmem:[%s190 + $0x34] sm:$0xf]
      %v216 = vld [vmem:[%s190 + $0x38] sm:$0xf]
      %v217 = vld [vmem:[%s190 + $0x3c] sm:$0xf]
      %v218 = vld [vmem:[%s190 + $0x40] sm:$0xf]
      %v219 = vld [vmem:[%s190 + $0x44] sm:$0xf]
      %v220 = vld [vmem:[%s190 + $0x48] sm:$0xf]
      %v221 = vld [vmem:[%s190 + $0x4c] sm:$0xf]
      %v222 = vld [vmem:[%s190 + $0x50] sm:$0xf]
      %v223 = vld [vmem:[%s190 + $0x54] sm:$0xf]
      %v224 = vld [vmem:[%s190 + $0x58] sm:$0xf]
      %v225 = vld [vmem:[%s190 + $0x5c] sm:$0xf]
      %v226 = vld [vmem:[%s190 + $0x60] sm:$0xf]
      %v227 = vld [vmem:[%s190 + $0x64] sm:$0xf]
      %v228 = vld [vmem:[%s190 + $0x68] sm:$0xf]
      %v229 = vld [vmem:[%s190 + $0x6c] sm:$0xf]
      %v230 = vld [vmem:[%s190 + $0x70] sm:$0xf]
      %v231 = vld [vmem:[%s190 + $0x74] sm:$0xf]
      %v232 = vld [vmem:[%s190 + $0x78] sm:$0xf]
      %v233 = vld [vmem:[%s190 + $0x7c] sm:$0xf]
      %v234 = vld [vmem:[%s1] sm:$0xf]
      %v235 = vld [vmem:[%s1 + $0x4] sm:$0xf]
      %v236 = vld [vmem:[%s1 + $0x8] sm:$0xf]
      %v237 = vld [vmem:[%s1 + $0xc] sm:$0xf]
      %v238 = vld [vmem:[%s2] sm:$0x1]
      %v240 = vlaneseq
      %v241 = vshrl.u32 %v240, 7
      %v242 = vsub.s32 0, %v241
      %v243 = vrot.slane %v238, %v242
      %v277 = vunpack.c.l.b16 %v202
      %v278 = vunpack.c.l.b16 %v203
      %v279 = vunpack.c.l.b16 %v204
      %v280 = vunpack.c.l.b16 %v205
      %v281 = vunpack.c.l.b16 %v206
      %v282 = vunpack.c.l.b16 %v207
      %v283 = vunpack.c.l.b16 %v208
      %v284 = vunpack.c.l.b16 %v209
      %v285 = vunpack.c.l.b16 %v210
      %v286 = vunpack.c.l.b16 %v211
      %v287 = vunpack.c.l.b16 %v212
      %v288 = vunpack.c.l.b16 %v213
      %v289 = vunpack.c.l.b16 %v214
      %v290 = vunpack.c.l.b16 %v215
      %v291 = vunpack.c.l.b16 %v216
      %v292 = vunpack.c.l.b16 %v217
      %v293 = vunpack.c.l.b16 %v218
      %v294 = vunpack.c.l.b16 %v219
      %v295 = vunpack.c.l.b16 %v220
      %v296 = vunpack.c.l.b16 %v221
      %v297 = vunpack.c.l.b16 %v222
      %v298 = vunpack.c.l.b16 %v223
      %v299 = vunpack.c.l.b16 %v224
      %v300 = vunpack.c.l.b16 %v225
      %v301 = vunpack.c.l.b16 %v226
      %v302 = vunpack.c.l.b16 %v227
      %v303 = vunpack.c.l.b16 %v228
      %v304 = vunpack.c.l.b16 %v229
      %v305 = vunpack.c.l.b16 %v230
      %v306 = vunpack.c.l.b16 %v231
      %v307 = vunpack.c.l.b16 %v232
      %v308 = vunpack.c.l.b16 %v233
      %v309 = vpack.c.b16 %v278, %v277
      %v310 = vpack.c.b16 %v280, %v279
      %v311 = vpack.c.b16 %v282, %v281
      %v312 = vpack.c.b16 %v284, %v283
      %v313 = vpack.c.b16 %v286, %v285
      %v314 = vpack.c.b16 %v288, %v287
      %v315 = vpack.c.b16 %v290, %v289
      %v316 = vpack.c.b16 %v292, %v291
      %v317 = vpack.c.b16 %v294, %v293
      %v318 = vpack.c.b16 %v296, %v295
      %v319 = vpack.c.b16 %v298, %v297
      %v320 = vpack.c.b16 %v300, %v299
      %v321 = vpack.c.b16 %v302, %v301
      %v322 = vpack.c.b16 %v304, %v303
      %v323 = vpack.c.b16 %v306, %v305
      %v324 = vpack.c.b16 %v308, %v307
      %v329 = vunpack.c.l.b16 %v234
      %v330 = vunpack.c.l.b16 %v235
      %v331 = vunpack.c.l.b16 %v236
      %v332 = vunpack.c.l.b16 %v237
      %v333 = vpack.c.b16 %v330, %v329
      %v334 = vpack.c.b16 %v332, %v331
      %vm337 = vcmask 261120
      %v339 = vsel %vm337, %v309, 0
      %v342 = vsel %vm337, %v310, 0
      %v345 = vsel %vm337, %v311, 0
      %v348 = vsel %vm337, %v312, 0
      %v351 = vsel %vm337, %v313, 0
      %v354 = vsel %vm337, %v314, 0
      %v357 = vsel %vm337, %v315, 0
      %v360 = vsel %vm337, %v316, 0
      %v363 = vsel %vm337, %v317, 0
      %v366 = vsel %vm337, %v318, 0
      %v369 = vsel %vm337, %v319, 0
      %v372 = vsel %vm337, %v320, 0
      %v375 = vsel %vm337, %v321, 0
      %v378 = vsel %vm337, %v322, 0
      %v381 = vsel %vm337, %v323, 0
      %v384 = vsel %vm337, %v324, 0
      %386 = vmatprep.subr.bf16.mxu0 0
      %387 = vmatpush1.bf16.msra.mxu0 %v333
      %388 = vmatprep.subr.bf16.mxu0 0
      %389 = vmatpush1.bf16.msra.mxu0 %v334
      %390 = vmatprep.subr.bf16.mxu0 0
      %391 = vmatpush1.bf16.msra.mxu0 0
      %392 = vmatprep.subr.bf16.mxu0 0
      %393 = vmatpush1.bf16.msra.mxu0 0
      %394 = vmatprep.subr.bf16.mxu0 0
      %395 = vmatpush1.bf16.msra.mxu0 0
      %396 = vmatprep.subr.bf16.mxu0 0
      %397 = vmatpush1.bf16.msra.mxu0 0
      %398 = vmatprep.subr.bf16.mxu0 0
      %399 = vmatpush1.bf16.msra.mxu0 0
      %400 = vmatprep.subr.bf16.mxu0 0
      %401 = vmatpush1.bf16.msra.mxu0 0
      %402 = vmatprep.subr.bf16.mxu0 0
      %403 = vmatpush1.bf16.msra.mxu0 0
      %404 = vmatprep.subr.bf16.mxu0 0
      %405 = vmatpush1.bf16.msra.mxu0 0
      %406 = vmatprep.subr.bf16.mxu0 0
      %407 = vmatpush1.bf16.msra.mxu0 0
      %408 = vmatprep.subr.bf16.mxu0 0
      %409 = vmatpush1.bf16.msra.mxu0 0
      %410 = vmatprep.subr.bf16.mxu0 0
      %411 = vmatpush1.bf16.msra.mxu0 0
      %412 = vmatprep.subr.bf16.mxu0 0
      %413 = vmatpush1.bf16.msra.mxu0 0
      %414 = vmatprep.subr.bf16.mxu0 0
      %415 = vmatpush1.bf16.msra.mxu0 0
      %416 = vmatprep.subr.bf16.mxu0 0
      %417 = vmatpush1.bf16.msra.mxu0 0
      %418 = vmatprep.mubr.bf16.mxu0 0
      %419 = vmatmul.mubr.bf16.gmra.mrb[0].mxu0 %v339
      %v420 = vpop.f32.mrb[0].mxu0
      %v421 = vadd.f32 %v243, %v420
      %v422 = vpop.f32.mrb[0].mxu0
      %v423 = vpop.f32.mrb[0].mxu0
      %v424 = vadd.f32 %v243, %v423
      %v425 = vpop.f32.mrb[0].mxu0
      %426 = vmatprep.mubr.bf16.mxu0 0
      %427 = vmatmul.mubr.bf16.gmra.mrb[0].mxu0 %v342
      %v428 = vpop.f32.mrb[0].mxu0
      %v429 = vadd.f32 %v243, %v428
      %v430 = vpop.f32.mrb[0].mxu0
      %v431 = vpop.f32.mrb[0].mxu0
      %v432 = vadd.f32 %v243, %v431
      %v433 = vpop.f32.mrb[0].mxu0
      %434 = vmatprep.mubr.bf16.mxu0 0
      %435 = vmatmul.mubr.bf16.gmra.mrb[0].mxu0 %v345
      %v436 = vpop.f32.mrb[0].mxu0
      %v437 = vadd.f32 %v243, %v436
      %v438 = vpop.f32.mrb[0].mxu0
      %v439 = vpop.f32.mrb[0].mxu0
      %v440 = vadd.f32 %v243, %v439
      %v441 = vpop.f32.mrb[0].mxu0
      %442 = vmatprep.mubr.bf16.mxu0 0
      %443 = vmatmul.mubr.bf16.gmra.mrb[0].mxu0 %v348
      %v444 = vpop.f32.mrb[0].mxu0
      %v445 = vadd.f32 %v243, %v444
      %v446 = vpop.f32.mrb[0].mxu0
      %v447 = vpop.f32.mrb[0].mxu0
      %v448 = vadd.f32 %v243, %v447
      %v449 = vpop.f32.mrb[0].mxu0
      %450 = vmatprep.mubr.bf16.mxu0 0
      %451 = vmatmul.mubr.bf16.gmra.mrb[0].mxu0 %v351
      %v452 = vpop.f32.mrb[0].mxu0
      %v453 = vadd.f32 %v243, %v452
      %v454 = vpop.f32.mrb[0].mxu0
      %v455 = vpop.f32.mrb[0].mxu0
      %v456 = vadd.f32 %v243, %v455
      %v457 = vpop.f32.mrb[0].mxu0
      %458 = vmatprep.mubr.bf16.mxu0 0
      %459 = vmatmul.mubr.bf16.gmra.mrb[0].mxu0 %v354
      %v460 = vpop.f32.mrb[0].mxu0
      %v461 = vadd.f32 %v243, %v460
      %v462 = vpop.f32.mrb[0].mxu0
      %v463 = vpop.f32.mrb[0].mxu0
      %v464 = vadd.f32 %v243, %v463
      %v465 = vpop.f32.mrb[0].mxu0
      %466 = vmatprep.mubr.bf16.mxu0 0
      %467 = vmatmul.mubr.bf16.gmra.mrb[0].mxu0 %v357
      %v468 = vpop.f32.mrb[0].mxu0
      %v469 = vadd.f32 %v243, %v468
      %v470 = vpop.f32.mrb[0].mxu0
      %v471 = vpop.f32.mrb[0].mxu0
      %v472 = vadd.f32 %v243, %v471
      %v473 = vpop.f32.mrb[0].mxu0
      %474 = vmatprep.mubr.bf16.mxu0 0
      %475 = vmatmul.mubr.bf16.gmra.mrb[0].mxu0 %v360
      %v476 = vpop.f32.mrb[0].mxu0
      %v477 = vadd.f32 %v243, %v476
      %v478 = vpop.f32.mrb[0].mxu0
      %v479 = vpop.f32.mrb[0].mxu0
      %v480 = vadd.f32 %v243, %v479
      %v481 = vpop.f32.mrb[0].mxu0
      %482 = vmatprep.mubr.bf16.mxu0 0
      %483 = vmatmul.mubr.bf16.gmra.mrb[0].mxu0 %v363
      %v484 = vpop.f32.mrb[0].mxu0
      %v485 = vadd.f32 %v243, %v484
      %v486 = vpop.f32.mrb[0].mxu0
      %v487 = vpop.f32.mrb[0].mxu0
      %v488 = vadd.f32 %v243, %v487
      %v489 = vpop.f32.mrb[0].mxu0
      %490 = vmatprep.mubr.bf16.mxu0 0
      %491 = vmatmul.mubr.bf16.gmra.mrb[0].mxu0 %v366
      %v492 = vpop.f32.mrb[0].mxu0
      %v493 = vadd.f32 %v243, %v492
      %v494 = vpop.f32.mrb[0].mxu0
      %v495 = vpop.f32.mrb[0].mxu0
      %v496 = vadd.f32 %v243, %v495
      %v497 = vpop.f32.mrb[0].mxu0
      %498 = vmatprep.mubr.bf16.mxu0 0
      %499 = vmatmul.mubr.bf16.gmra.mrb[0].mxu0 %v369
      %v500 = vpop.f32.mrb[0].mxu0
      %v501 = vadd.f32 %v243, %v500
      %v502 = vpop.f32.mrb[0].mxu0
      %v503 = vpop.f32.mrb[0].mxu0
      %v504 = vadd.f32 %v243, %v503
      %v505 = vpop.f32.mrb[0].mxu0
      %506 = vmatprep.mubr.bf16.mxu0 0
      %507 = vmatmul.mubr.bf16.gmra.mrb[0].mxu0 %v372
      %v508 = vpop.f32.mrb[0].mxu0
      %v509 = vadd.f32 %v243, %v508
      %v510 = vpop.f32.mrb[0].mxu0
      %v511 = vpop.f32.mrb[0].mxu0
      %v512 = vadd.f32 %v243, %v511
      %v513 = vpop.f32.mrb[0].mxu0
      %514 = vmatprep.mubr.bf16.mxu0 0
      %515 = vmatmul.mubr.bf16.gmra.mrb[0].mxu0 %v375
      %v516 = vpop.f32.mrb[0].mxu0
      %v517 = vadd.f32 %v243, %v516
      %v518 = vpop.f32.mrb[0].mxu0
      %v519 = vpop.f32.mrb[0].mxu0
      %v520 = vadd.f32 %v243, %v519
      %v521 = vpop.f32.mrb[0].mxu0
      %522 = vmatprep.mubr.bf16.mxu0 0
      %523 = vmatmul.mubr.bf16.gmra.mrb[0].mxu0 %v378
      %v524 = vpop.f32.mrb[0].mxu0
      %v525 = vadd.f32 %v243, %v524
      %v526 = vpop.f32.mrb[0].mxu0
      %v527 = vpop.f32.mrb[0].mxu0
      %v528 = vadd.f32 %v243, %v527
      %v529 = vpop.f32.mrb[0].mxu0
      %530 = vmatprep.mubr.bf16.mxu0 0
      %531 = vmatmul.mubr.bf16.gmra.mrb[0].mxu0 %v381
      %v532 = vpop.f32.mrb[0].mxu0
      %v533 = vadd.f32 %v243, %v532
      %v534 = vpop.f32.mrb[0].mxu0
      %v535 = vpop.f32.mrb[0].mxu0
      %v536 = vadd.f32 %v243, %v535
      %v537 = vpop.f32.mrb[0].mxu0
      %538 = vmatprep.mubr.bf16.mxu0 0
      %539 = vmatmul.mubr.bf16.gmra.mrb[0].mxu0 %v384
      %v540 = vpop.f32.mrb[0].mxu0
      %v541 = vadd.f32 %v243, %v540
      %v542 = vpop.f32.mrb[0].mxu0
      %v543 = vpop.f32.mrb[0].mxu0
      %v544 = vadd.f32 %v243, %v543
      %v545 = vpop.f32.mrb[0].mxu0
      %546 = vdwg.mxu0
      %v547 = vpack.c.bf16 %v424, %v421
      %v548 = vpack.c.bf16 %v432, %v429
      %v549 = vpack.c.bf16 %v440, %v437
      %v550 = vpack.c.bf16 %v448, %v445
      %v551 = vpack.c.bf16 %v456, %v453
      %v552 = vpack.c.bf16 %v464, %v461
      %v553 = vpack.c.bf16 %v472, %v469
      %v554 = vpack.c.bf16 %v480, %v477
      %v555 = vpack.c.bf16 %v488, %v485
      %v556 = vpack.c.bf16 %v496, %v493
      %v557 = vpack.c.bf16 %v504, %v501
      %v558 = vpack.c.bf16 %v512, %v509
      %v559 = vpack.c.bf16 %v520, %v517
      %v560 = vpack.c.bf16 %v528, %v525
      %v561 = vpack.c.bf16 %v536, %v533
      %v562 = vpack.c.bf16 %v544, %v541
      %v563 = vxor.u32 %v547, 2147516416
      %v564 = vxor.u32 %v548, 2147516416
      %v565 = vxor.u32 %v549, 2147516416
      %v566 = vxor.u32 %v550, 2147516416
      %v567 = vxor.u32 %v551, 2147516416
      %v568 = vxor.u32 %v552, 2147516416
      %v569 = vxor.u32 %v553, 2147516416
      %v570 = vxor.u32 %v554, 2147516416
      %v571 = vxor.u32 %v555, 2147516416
      %v572 = vxor.u32 %v556, 2147516416
      %v573 = vxor.u32 %v557, 2147516416
      %v574 = vxor.u32 %v558, 2147516416
      %v575 = vxor.u32 %v559, 2147516416
      %v576 = vxor.u32 %v560, 2147516416
      %v577 = vxor.u32 %v561, 2147516416
      %v578 = vxor.u32 %v562, 2147516416
      %v580 = vmul.bf16 %v563, 1069105081
      %v581 = vpow.bf16.pop %v580
      %v583 = vmul.bf16 %v564, 1069105081
      %v584 = vpow.bf16.pop %v583
      %v586 = vmul.bf16 %v565, 1069105081
      %v587 = vpow.bf16.pop %v586
      %v589 = vmul.bf16 %v566, 1069105081
      %v590 = vpow.bf16.pop %v589
      %v592 = vmul.bf16 %v567, 1069105081
      %v593 = vpow.bf16.pop %v592
      %v595 = vmul.bf16 %v568, 1069105081
      %v596 = vpow.bf16.pop %v595
      %v598 = vmul.bf16 %v569, 1069105081
      %v599 = vpow.bf16.pop %v598
      %v601 = vmul.bf16 %v570, 1069105081
      %v602 = vpow.bf16.pop %v601
      %v604 = vmul.bf16 %v571, 1069105081
      %v605 = vpow.bf16.pop %v604
      %v607 = vmul.bf16 %v572, 1069105081
      %v608 = vpow.bf16.pop %v607
      %v610 = vmul.bf16 %v573, 1069105081
      %v611 = vpow.bf16.pop %v610
      %v613 = vmul.bf16 %v574, 1069105081
      %v614 = vpow.bf16.pop %v613
      %v616 = vmul.bf16 %v575, 1069105081
      %v617 = vpow.bf16.pop %v616
      %v619 = vmul.bf16 %v576, 1069105081
      %v620 = vpow.bf16.pop %v619
      %v622 = vmul.bf16 %v577, 1069105081
      %v623 = vpow.bf16.pop %v622
      %v625 = vmul.bf16 %v578, 1069105081
      %v626 = vpow.bf16.pop %v625
      %v627 = vadd.bf16 %v581, 1065369472
      %v628 = vadd.bf16 %v584, 1065369472
      %v629 = vadd.bf16 %v587, 1065369472
      %v630 = vadd.bf16 %v590, 1065369472
      %v631 = vadd.bf16 %v593, 1065369472
      %v632 = vadd.bf16 %v596, 1065369472
      %v633 = vadd.bf16 %v599, 1065369472
      %v634 = vadd.bf16 %v602, 1065369472
      %v635 = vadd.bf16 %v605, 1065369472
      %v636 = vadd.bf16 %v608, 1065369472
      %v637 = vadd.bf16 %v611, 1065369472
      %v638 = vadd.bf16 %v614, 1065369472
      %v639 = vadd.bf16 %v617, 1065369472
      %v640 = vadd.bf16 %v620, 1065369472
      %v641 = vadd.bf16 %v623, 1065369472
      %v642 = vadd.bf16 %v626, 1065369472
      %v643 = vrcp.bf16.pop %v627
      %v644 = vmul.bf16 1065369472, %v643
      %v645 = vrcp.bf16.pop %v628
      %v646 = vmul.bf16 1065369472, %v645
      %v647 = vrcp.bf16.pop %v629
      %v648 = vmul.bf16 1065369472, %v647
      %v649 = vrcp.bf16.pop %v630
      %v650 = vmul.bf16 1065369472, %v649
      %v651 = vrcp.bf16.pop %v631
      %v652 = vmul.bf16 1065369472, %v651
      %v653 = vrcp.bf16.pop %v632
      %v654 = vmul.bf16 1065369472, %v653
      %v655 = vrcp.bf16.pop %v633
      %v656 = vmul.bf16 1065369472, %v655
      %v657 = vrcp.bf16.pop %v634
      %v658 = vmul.bf16 1065369472, %v657
      %v659 = vrcp.bf16.pop %v635
      %v660 = vmul.bf16 1065369472, %v659
      %v661 = vrcp.bf16.pop %v636
      %v662 = vmul.bf16 1065369472, %v661
      %v663 = vrcp.bf16.pop %v637
      %v664 = vmul.bf16 1065369472, %v663
      %v665 = vrcp.bf16.pop %v638
      %v666 = vmul.bf16 1065369472, %v665
      %v667 = vrcp.bf16.pop %v639
      %v668 = vmul.bf16 1065369472, %v667
      %v669 = vrcp.bf16.pop %v640
      %v670 = vmul.bf16 1065369472, %v669
      %v671 = vrcp.bf16.pop %v641
      %v672 = vmul.bf16 1065369472, %v671
      %v673 = vrcp.bf16.pop %v642
      %v674 = vmul.bf16 1065369472, %v673
      %v675 = vmul.bf16 %v547, %v644
      %v676 = vmul.bf16 %v548, %v646
      %v677 = vmul.bf16 %v549, %v648
      %v678 = vmul.bf16 %v550, %v650
      %v679 = vmul.bf16 %v551, %v652
      %v680 = vmul.bf16 %v552, %v654
      %v681 = vmul.bf16 %v553, %v656
      %v682 = vmul.bf16 %v554, %v658
      %v683 = vmul.bf16 %v555, %v660
      %v684 = vmul.bf16 %v556, %v662
      %v685 = vmul.bf16 %v557, %v664
      %v686 = vmul.bf16 %v558, %v666
      %v687 = vmul.bf16 %v559, %v668
      %v688 = vmul.bf16 %v560, %v670
      %v689 = vmul.bf16 %v561, %v672
      %v690 = vmul.bf16 %v562, %v674
      %v691 = vunpack.c.l.bf16 %v675
      %v692 = vunpack.c.h.bf16 %v675
      %v693 = vunpack.c.l.bf16 %v676
      %v694 = vunpack.c.h.bf16 %v676
      %v695 = vunpack.c.l.bf16 %v677
      %v696 = vunpack.c.h.bf16 %v677
      %v697 = vunpack.c.l.bf16 %v678
      %v698 = vunpack.c.h.bf16 %v678
      %v699 = vunpack.c.l.bf16 %v679
      %v700 = vunpack.c.h.bf16 %v679
      %v701 = vunpack.c.l.bf16 %v680
      %v702 = vunpack.c.h.bf16 %v680
      %v703 = vunpack.c.l.bf16 %v681
      %v704 = vunpack.c.h.bf16 %v681
      %v705 = vunpack.c.l.bf16 %v682
      %v706 = vunpack.c.h.bf16 %v682
      %v707 = vunpack.c.l.bf16 %v683
      %v708 = vunpack.c.h.bf16 %v683
      %v709 = vunpack.c.l.bf16 %v684
      %v710 = vunpack.c.h.bf16 %v684
      %v711 = vunpack.c.l.bf16 %v685
      %v712 = vunpack.c.h.bf16 %v685
      %v713 = vunpack.c.l.bf16 %v686
      %v714 = vunpack.c.h.bf16 %v686
      %v715 = vunpack.c.l.bf16 %v687
      %v716 = vunpack.c.h.bf16 %v687
      %v717 = vunpack.c.l.bf16 %v688
      %v718 = vunpack.c.h.bf16 %v688
      %v719 = vunpack.c.l.bf16 %v689
      %v720 = vunpack.c.h.bf16 %v689
      %v721 = vunpack.c.l.bf16 %v690
      %v722 = vunpack.c.h.bf16 %v690
      %v723 = vld [vmem:[#allocation2] sm:$0x1]
      %v724 = vadd.f32 %v691, %v692
      %v725 = vadd.f32 %v724, %v693
      %v726 = vadd.f32 %v725, %v694
      %v727 = vadd.f32 %v726, %v695
      %v728 = vadd.f32 %v727, %v696
      %v729 = vadd.f32 %v728, %v697
      %v730 = vadd.f32 %v729, %v698
      %v731 = vadd.f32 %v730, %v699
      %v732 = vadd.f32 %v731, %v700
      %v733 = vadd.f32 %v732, %v701
      %v734 = vadd.f32 %v733, %v702
      %v735 = vadd.f32 %v734, %v703
      %v736 = vadd.f32 %v735, %v704
      %v737 = vadd.f32 %v736, %v705
      %v738 = vadd.f32 %v737, %v706
      %v739 = vadd.f32 %v738, %v707
      %v740 = vadd.f32 %v739, %v708
      %v741 = vadd.f32 %v740, %v709
      %v742 = vadd.f32 %v741, %v710
      %v743 = vadd.f32 %v742, %v711
      %v744 = vadd.f32 %v743, %v712
      %v745 = vadd.f32 %v744, %v713
      %v746 = vadd.f32 %v745, %v714
      %v747 = vadd.f32 %v746, %v715
      %v748 = vadd.f32 %v747, %v716
      %v749 = vadd.f32 %v748, %v717
      %v750 = vadd.f32 %v749, %v718
      %v751 = vadd.f32 %v750, %v719
      %v752 = vadd.f32 %v751, %v720
      %v753 = vadd.f32 %v752, %v721
      %v754 = vadd.f32 %v753, %v722
      %v755 = vrot.slane %v754, 4
      %v756 = vadd.f32 %v754, %v755
      %v757 = vrot.slane %v756, 2
      %v758 = vadd.f32 %v756, %v757
      %v759 = vrot.slane %v758, 1
      %v760 = vadd.f32 %v758, %v759
      %v761 = vadd.f32 %v723, %v760
      %762 = vst [vmem:[#allocation2] sm:$0x1] %v761
      // Predicated region
      $region37: #{shopee_forward.2} parent=31 // pred_check
        %p763 = pneg %p197
      $region38: #{shopee_forward.2} parent=31 // pred_check_branch
        %765 = sbr.rel (%p763) target = $region40
      $region39: #{shopee_forward.2} parent=31 // pred_region
        %v766 = vld [vmem:[#allocation2] sm:$0x1]
        %v767 = vmul.f32 %v766, 0.00390625
        %768 = vst [vmem:[%s194] sm:$0x1] %v767
      $region40: #{shopee_forward.2} parent=31 // pred_fallthru
        _
      %p769 = scmp.lt.s32.totalorder %s18, 1
      %s770 = scalar_select %p769, %s18, 1
      %s771 = scalar_lea.vmem %s3, %s770
      // Predicated region
      $region41: #{shopee_forward.2} parent=31 // pred_check
        %p772 = pneg %p114
      $region42: #{shopee_forward.2} parent=31 // pred_check_branch
        %774 = sbr.rel (%p772) target = $region44
      $region43: #{shopee_forward.2} parent=31 // pred_region
        _
      $region44: #{shopee_forward.2} parent=31 // pred_fallthru
        _
    $region32: #{shopee_forward.2} parent=5 // pred_fallthru
      _
    %p775 = scmp.le.s32.totalorder 2, %s9
    // Predicated region
    $region45: #{shopee_forward.2} parent=5 // pred_check
      %p776 = pneg %p775
    $region46: #{shopee_forward.2} parent=5 // pred_check_branch
      %778 = sbr.rel (%p776) target = $region48
    $region47: #{shopee_forward.2} parent=5 // pred_region
      %s779 = ssub.s32 %s9, 2
      // Predicated region
      $region49: #{shopee_forward.2} parent=47 // pred_check
        %p780 = pneg %p120
      $region50: #{shopee_forward.2} parent=47 // pred_check_branch
        %782 = sbr.rel (%p780) target = $region52
      $region51: #{shopee_forward.2} parent=47 // pred_region
        %p783 = scmp.lt.s32.totalorder %s20, 1
        %s784 = scalar_select %p783, %s20, 1
        %s785 = scalar_lea.vmem %s3, %s784
      $region52: #{shopee_forward.2} parent=47 // pred_fallthru
        _
    $region48: #{shopee_forward.2} parent=5 // pred_fallthru
      _
  $region6: #{shopee_forward.2} parent=0 // loop_footer
    %s13 = sadd.s32 1, %s9
  $region7: #{shopee_forward.2} parent=0 // loop_footer_branch
    %8 = sbr.rel target = $region3
  $region8: #{shopee_forward.2} parent=0 // loop_exit
    _

// kernel: shopee_forward.3
$region0: #{shopee_forward.3}
  #allocation0 [shape = 'u32[]', space=smem, size = 0x4, offset = 0x4, fixed_abs, tag = 'smem constant byte address 0x4 - core index']
  #allocation1 [shape = 'u32[144,128]{1,0:T(1,128)}', space=vmem, size = 0x12000, scoped, tag = 'internal scratch']
  #allocation2 [shape = 'bf16[8,128]{1,0:T(8,128)(2,1)}', space=vmem, size = 0x800, scoped, tag = 'scratch operand']
  #allocation3 [shape = 'f32[8,1]{1,0:T(8,128)}', space=vmem, size = 0x1000, scoped, tag = 'scratch operand']
  #allocation4 [shape = 'f32[8,1]{1,0:T(8,128)}', space=vmem, size = 0x1000, scoped, tag = 'scratch operand']
  #allocation5 [shape = 'f32[8,1]{1,0:T(8,128)}', space=vmem, size = 0x1000, scoped, tag = 'scratch operand']
  %s0 = inlined_call_operand.vmem [shape: bf16[8,128], index: 0, kind: input, shape index: {}]
  %s1 = inlined_call_operand.vmem [shape: bf16[128,128], index: 1, kind: input, shape index: {}]
  %s2 = inlined_call_operand.vmem [shape: f32[1,128], index: 2, kind: input, shape index: {}]
  %s3 = inlined_call_operand.vmem [shape: f32[1,128], index: 3, kind: input, shape index: {}]
  %s4 = inlined_call_operand.vmem [shape: f32[1,128], index: 4, kind: input, shape index: {}]
  %s5 = inlined_call_operand.vmem [shape: bf16[128,512], index: 5, kind: input, shape index: {}]
  %s6 = inlined_call_operand.vmem [shape: s32[8,1], index: 6, kind: input, shape index: {}]
  %s7 = inlined_call_operand.vmem [shape: f32[8,512], index: 7, kind: output, shape index: {0}]
  %s8 = inlined_call_operand.vmem [shape: f32[2,8,1], index: 8, kind: output, shape index: {1}]
  %s9 = inlined_call_operand.vmem [shape: f32[2,8,1], index: 9, kind: output, shape index: {2}]
  %s10 = inlined_call_operand.vmem [shape: f32[2,8,1], index: 10, kind: output, shape index: {3}]
  %11 = xla_tuple %s7, %s8, %s9, %s10
  %s12 = sld [smem:[#allocation0]]
  $region127: #{shopee_forward.3} parent=0
    _
  %s14 = ssub.s32 1, %s12
  %s15 = scalar_select 0, %s14, %s12
  $region1: #{shopee_forward.3} parent=0
    #allocation6 [shape = 'u8[131072]{0}', space=vmem, size = 0x20000, scoped, tag = 'input window, operand 5']
    loop: start=0, step=1, limit=4
    $region2: #{shopee_forward.3} parent=1 // loop_pre_header
      _
    $region3: #{shopee_forward.3} parent=1 // loop_header
      %s17 = sphi 0, %s21
      %p18 = scmp.ge.s32.totalorder %s17, 4
      %s24 = sphi 0, %s36
      %s25 = sphi 0, %s32
      %s26 = sphi 0, %s24
      %s27 = sphi 0, %s25
      %s28 = sphi 0, %s26
      %s29 = sphi 0, %s27
      %s37 = sphi 0, %s37
      %s39 = sphi 0, %s37
      %s40 = sphi 0, %s39
      %s54 = sphi 0, %s40
      %s58 = sphi 0, %s58
      %s60 = sphi 0, %s58
      %s61 = sphi 0, %s60
      %s75 = sphi 0, %s61
      %s79 = sphi 0, %s79
      %s81 = sphi 0, %s79
      %s82 = sphi 0, %s81
      %s96 = sphi 0, %s82
      %s100 = sphi 0, %s100
      %s102 = sphi 0, %s100
      %s103 = sphi 0, %s102
      %s117 = sphi 0, %s103
      %s121 = sphi 0, %s121
      %s123 = sphi 0, %s121
      %s124 = sphi 0, %s123
      %s138 = sphi 0, %s124
      %s146 = sphi 0, %s148
      %s149 = sphi 0, %s146
      %s150 = sphi 0, %s149
      %s166 = sphi 0, %s150
      %s170 = sphi 0, %s170
      %s172 = sphi 0, %s170
      %s173 = sphi 0, %s172
      %s187 = sphi 0, %s173
      %s195 = sphi 0, %s197
      %s198 = sphi 0, %s195
      %s199 = sphi 0, %s198
      %s215 = sphi 0, %s199
      %s221 = sphi 0, %s223
      %s224 = sphi 0, %s221
      %s225 = sphi 0, %s224
      %s241 = sphi 0, %s225
      %s247 = sphi 0, %s249
      %s250 = sphi 0, %s247
      %s251 = sphi 0, %s250
      %s267 = sphi 0, %s251
      %s273 = sphi 0, %s275
      %s276 = sphi 0, %s273
      %s277 = sphi 0, %s276
      %s293 = sphi 0, %s277
    $region4: #{shopee_forward.3} parent=1 // loop_header_branch
      %20 = sbr.rel (%p18) target = $region8
    $region5: #{shopee_forward.3} parent=1 // loop_body
      %s22 = ssub.s32 %s17, 1
      %s23 = ssub.s32 %s17, 2
      %s30 = sadd.s32 1, %s25
      %p31 = scmp.ge.s32.totalorder %s30, 1
      %s32 = scalar_select %p31, 0, %s30
      %s33 = sadd.s32 1, %s24
      %s34 = scalar_select %p31, %s33, %s24
      %p35 = scmp.ge.s32.totalorder %s34, 2
      %s36 = scalar_select %p35, 0, %s34
      %s38 = sadd.s32 %s37, 1
      %p41 = scmp.eq.s32.totalorder %s17, 1
      %p42 = scmp.ne.s32.totalorder %s37, %s39
      %p43 = scmp.eq.s32.totalorder %s17, 0
      %p44 = por %p42, %p43
      %p45 = scmp.ne.s32.totalorder %s37, %s39
      %p46 = scmp.eq.s32.totalorder %s22, 1
      %p47 = por %p45, %p46
      %p48 = scmp.ne.s32.totalorder %s39, %s40
      %p49 = scmp.eq.s32.totalorder %s22, 0
      %p50 = por %p48, %p49
      %p51 = scmp.ne.s32.totalorder %s39, %s40
      %p52 = scmp.eq.s32.totalorder %s23, 1
      %p53 = por %p51, %p52
      %p55 = scmp.ne.s32.totalorder %s40, %s54
      %p56 = scmp.eq.s32.totalorder %s23, 0
      %p57 = por %p55, %p56
      %s59 = sadd.s32 %s58, 1
      %p62 = scmp.eq.s32.totalorder %s17, 1
      %p63 = scmp.ne.s32.totalorder %s58, %s60
      %p64 = scmp.eq.s32.totalorder %s17, 0
      %p65 = por %p63, %p64
      %p66 = scmp.ne.s32.totalorder %s58, %s60
      %p67 = scmp.eq.s32.totalorder %s22, 1
      %p68 = por %p66, %p67
      %p69 = scmp.ne.s32.totalorder %s60, %s61
      %p70 = scmp.eq.s32.totalorder %s22, 0
      %p71 = por %p69, %p70
      %p72 = scmp.ne.s32.totalorder %s60, %s61
      %p73 = scmp.eq.s32.totalorder %s23, 1
      %p74 = por %p72, %p73
      %p76 = scmp.ne.s32.totalorder %s61, %s75
      %p77 = scmp.eq.s32.totalorder %s23, 0
      %p78 = por %p76, %p77
      %s80 = sadd.s32 %s79, 1
      %p83 = scmp.eq.s32.totalorder %s17, 1
      %p84 = scmp.ne.s32.totalorder %s79, %s81
      %p85 = scmp.eq.s32.totalorder %s17, 0
      %p86 = por %p84, %p85
      %p87 = scmp.ne.s32.totalorder %s79, %s81
      %p88 = scmp.eq.s32.totalorder %s22, 1
      %p89 = por %p87, %p88
      %p90 = scmp.ne.s32.totalorder %s81, %s82
      %p91 = scmp.eq.s32.totalorder %s22, 0
      %p92 = por %p90, %p91
      %p93 = scmp.ne.s32.totalorder %s81, %s82
      %p94 = scmp.eq.s32.totalorder %s23, 1
      %p95 = por %p93, %p94
      %p97 = scmp.ne.s32.totalorder %s82, %s96
      %p98 = scmp.eq.s32.totalorder %s23, 0
      %p99 = por %p97, %p98
      %s101 = sadd.s32 %s100, 1
      %p104 = scmp.eq.s32.totalorder %s17, 1
      %p105 = scmp.ne.s32.totalorder %s100, %s102
      %p106 = scmp.eq.s32.totalorder %s17, 0
      %p107 = por %p105, %p106
      %p108 = scmp.ne.s32.totalorder %s100, %s102
      %p109 = scmp.eq.s32.totalorder %s22, 1
      %p110 = por %p108, %p109
      %p111 = scmp.ne.s32.totalorder %s102, %s103
      %p112 = scmp.eq.s32.totalorder %s22, 0
      %p113 = por %p111, %p112
      %p114 = scmp.ne.s32.totalorder %s102, %s103
      %p115 = scmp.eq.s32.totalorder %s23, 1
      %p116 = por %p114, %p115
      %p118 = scmp.ne.s32.totalorder %s103, %s117
      %p119 = scmp.eq.s32.totalorder %s23, 0
      %p120 = por %p118, %p119
      %s122 = sadd.s32 %s121, 1
      %p125 = scmp.eq.s32.totalorder %s17, 1
      %p126 = scmp.ne.s32.totalorder %s121, %s123
      %p127 = scmp.eq.s32.totalorder %s17, 0
      %p128 = por %p126, %p127
      %p129 = scmp.ne.s32.totalorder %s121, %s123
      %p130 = scmp.eq.s32.totalorder %s22, 1
      %p131 = por %p129, %p130
      %p132 = scmp.ne.s32.totalorder %s123, %s124
      %p133 = scmp.eq.s32.totalorder %s22, 0
      %p134 = por %p132, %p133
      %p135 = scmp.ne.s32.totalorder %s123, %s124
      %p136 = scmp.eq.s32.totalorder %s23, 1
      %p137 = por %p135, %p136
      %p139 = scmp.ne.s32.totalorder %s124, %s138
      %p140 = scmp.eq.s32.totalorder %s23, 0
      %p141 = por %p139, %p140
      %s142 = sadd.s32 %s24, %s25
      %s143 = sadd.s32 %s36, %s32
      %s144 = ssub.s32 %s142, %s143
      %p145 = scmp.eq.s32.totalorder %s144, 0
      %s147 = sadd.s32 %s146, 1
      %s148 = scalar_select %p145, %s146, %s147
      %p151 = pneg %p145
      %p152 = scmp.eq.s32.totalorder %s17, 1
      %p153 = por %p151, %p152
      %p154 = scmp.ne.s32.totalorder %s146, %s149
      %p155 = scmp.eq.s32.totalorder %s17, 0
      %p156 = por %p154, %p155
      %p157 = scmp.ne.s32.totalorder %s146, %s149
      %p158 = scmp.eq.s32.totalorder %s22, 1
      %p159 = por %p157, %p158
      %p160 = scmp.ne.s32.totalorder %s149, %s150
      %p161 = scmp.eq.s32.totalorder %s22, 0
      %p162 = por %p160, %p161
      %p163 = scmp.ne.s32.totalorder %s149, %s150
      %p164 = scmp.eq.s32.totalorder %s23, 1
      %p165 = por %p163, %p164
      %p167 = scmp.ne.s32.totalorder %s150, %s166
      %p168 = scmp.eq.s32.totalorder %s23, 0
      %p169 = por %p167, %p168
      %s171 = sadd.s32 %s170, 1
      %p174 = scmp.eq.s32.totalorder %s17, 1
      %p175 = scmp.ne.s32.totalorder %s170, %s172
      %p176 = scmp.eq.s32.totalorder %s17, 0
      %p177 = por %p175, %p176
      %p178 = scmp.ne.s32.totalorder %s170, %s172
      %p179 = scmp.eq.s32.totalorder %s22, 1
      %p180 = por %p178, %p179
      %p181 = scmp.ne.s32.totalorder %s172, %s173
      %p182 = scmp.eq.s32.totalorder %s22, 0
      %p183 = por %p181, %p182
      %p184 = scmp.ne.s32.totalorder %s172, %s173
      %p185 = scmp.eq.s32.totalorder %s23, 1
      %p186 = por %p184, %p185
      %p188 = scmp.ne.s32.totalorder %s173, %s187
      %p189 = scmp.eq.s32.totalorder %s23, 0
      %p190 = por %p188, %p189
      %s191 = sadd.s32 %s24, %s25
      %s192 = sadd.s32 %s36, %s32
      %s193 = ssub.s32 %s191, %s192
      %p194 = scmp.eq.s32.totalorder %s193, 0
      %s196 = sadd.s32 %s195, 1
      %s197 = scalar_select %p194, %s195, %s196
      %p200 = pneg %p194
      %p201 = scmp.eq.s32.totalorder %s17, 1
      %p202 = por %p200, %p201
      %p203 = scmp.ne.s32.totalorder %s195, %s198
      %p204 = scmp.eq.s32.totalorder %s17, 0
      %p205 = por %p203, %p204
      %p206 = scmp.ne.s32.totalorder %s195, %s198
      %p207 = scmp.eq.s32.totalorder %s22, 1
      %p208 = por %p206, %p207
      %p209 = scmp.ne.s32.totalorder %s198, %s199
      %p210 = scmp.eq.s32.totalorder %s22, 0
      %p211 = por %p209, %p210
      %p212 = scmp.ne.s32.totalorder %s198, %s199
      %p213 = scmp.eq.s32.totalorder %s23, 1
      %p214 = por %p212, %p213
      %p216 = scmp.ne.s32.totalorder %s199, %s215
      %p217 = scmp.eq.s32.totalorder %s23, 0
      %p218 = por %p216, %p217
      %s219 = ssub.s32 %s24, %s36
      %p220 = scmp.eq.s32.totalorder %s219, 0
      %s222 = sadd.s32 %s221, 1
      %s223 = scalar_select %p220, %s221, %s222
      %p226 = pneg %p220
      %p227 = scmp.eq.s32.totalorder %s17, 1
      %p228 = por %p226, %p227
      %p229 = scmp.ne.s32.totalorder %s221, %s224
      %p230 = scmp.eq.s32.totalorder %s17, 0
      %p231 = por %p229, %p230
      %p232 = scmp.ne.s32.totalorder %s221, %s224
      %p233 = scmp.eq.s32.totalorder %s22, 1
      %p234 = por %p232, %p233
      %p235 = scmp.ne.s32.totalorder %s224, %s225
      %p236 = scmp.eq.s32.totalorder %s22, 0
      %p237 = por %p235, %p236
      %p238 = scmp.ne.s32.totalorder %s224, %s225
      %p239 = scmp.eq.s32.totalorder %s23, 1
      %p240 = por %p238, %p239
      %p242 = scmp.ne.s32.totalorder %s225, %s241
      %p243 = scmp.eq.s32.totalorder %s23, 0
      %p244 = por %p242, %p243
      %s245 = ssub.s32 %s24, %s36
      %p246 = scmp.eq.s32.totalorder %s245, 0
      %s248 = sadd.s32 %s247, 1
      %s249 = scalar_select %p246, %s247, %s248
      %p252 = pneg %p246
      %p253 = scmp.eq.s32.totalorder %s17, 1
      %p254 = por %p252, %p253
      %p255 = scmp.ne.s32.totalorder %s247, %s250
      %p256 = scmp.eq.s32.totalorder %s17, 0
      %p257 = por %p255, %p256
      %p258 = scmp.ne.s32.totalorder %s247, %s250
      %p259 = scmp.eq.s32.totalorder %s22, 1
      %p260 = por %p258, %p259
      %p261 = scmp.ne.s32.totalorder %s250, %s251
      %p262 = scmp.eq.s32.totalorder %s22, 0
      %p263 = por %p261, %p262
      %p264 = scmp.ne.s32.totalorder %s250, %s251
      %p265 = scmp.eq.s32.totalorder %s23, 1
      %p266 = por %p264, %p265
      %p268 = scmp.ne.s32.totalorder %s251, %s267
      %p269 = scmp.eq.s32.totalorder %s23, 0
      %p270 = por %p268, %p269
      %s271 = ssub.s32 %s24, %s36
      %p272 = scmp.eq.s32.totalorder %s271, 0
      %s274 = sadd.s32 %s273, 1
      %s275 = scalar_select %p272, %s273, %s274
      %p278 = pneg %p272
      %p279 = scmp.eq.s32.totalorder %s17, 1
      %p280 = por %p278, %p279
      %p281 = scmp.ne.s32.totalorder %s273, %s276
      %p282 = scmp.eq.s32.totalorder %s17, 0
      %p283 = por %p281, %p282
      %p284 = scmp.ne.s32.totalorder %s273, %s276
      %p285 = scmp.eq.s32.totalorder %s22, 1
      %p286 = por %p284, %p285
      %p287 = scmp.ne.s32.totalorder %s276, %s277
      %p288 = scmp.eq.s32.totalorder %s22, 0
      %p289 = por %p287, %p288
      %p290 = scmp.ne.s32.totalorder %s276, %s277
      %p291 = scmp.eq.s32.totalorder %s23, 1
      %p292 = por %p290, %p291
      %p294 = scmp.ne.s32.totalorder %s277, %s293
      %p295 = scmp.eq.s32.totalorder %s23, 0
      %p296 = por %p294, %p295
      %p297 = scmp.le.s32.totalorder 1, %s17
      %p298 = scmp.lt.s32.totalorder %s17, 3
      %p299 = pnand %p297, %p298
      %p300 = pneg %p299
      // Predicated region
      $region9: #{shopee_forward.3} parent=5 // pred_check
        _
      $region10: #{shopee_forward.3} parent=5 // pred_check_branch
        %302 = sbr.rel (%p299) target = $region12
      $region11: #{shopee_forward.3} parent=5 // pred_region
        %s303 = ssub.s32 %s17, 1
        // Predicated region
        $region13: #{shopee_forward.3} parent=11 // pred_check
          %p304 = pneg %p50
        $region14: #{shopee_forward.3} parent=11 // pred_check_branch
          %306 = sbr.rel (%p304) target = $region16
        $region15: #{shopee_forward.3} parent=11 // pred_region
          _
        $region16: #{shopee_forward.3} parent=11 // pred_fallthru
          _
        // Predicated region
        $region17: #{shopee_forward.3} parent=11 // pred_check
          %p307 = pneg %p71
        $region18: #{shopee_forward.3} parent=11 // pred_check_branch
          %309 = sbr.rel (%p307) target = $region20
        $region19: #{shopee_forward.3} parent=11 // pred_region
          _
        $region20: #{shopee_forward.3} parent=11 // pred_fallthru
          _
        // Predicated region
        $region21: #{shopee_forward.3} parent=11 // pred_check
          %p310 = pneg %p92
        $region22: #{shopee_forward.3} parent=11 // pred_check_branch
          %312 = sbr.rel (%p310) target = $region24
        $region23: #{shopee_forward.3} parent=11 // pred_region
          _
        $region24: #{shopee_forward.3} parent=11 // pred_fallthru
          _
        // Predicated region
        $region25: #{shopee_forward.3} parent=11 // pred_check
          %p313 = pneg %p113
        $region26: #{shopee_forward.3} parent=11 // pred_check_branch
          %315 = sbr.rel (%p313) target = $region28
        $region27: #{shopee_forward.3} parent=11 // pred_region
          _
        $region28: #{shopee_forward.3} parent=11 // pred_fallthru
          _
        // Predicated region
        $region29: #{shopee_forward.3} parent=11 // pred_check
          %p316 = pneg %p134
        $region30: #{shopee_forward.3} parent=11 // pred_check_branch
          %318 = sbr.rel (%p316) target = $region32
        $region31: #{shopee_forward.3} parent=11 // pred_region
          _
        $region32: #{shopee_forward.3} parent=11 // pred_fallthru
          _
        // Predicated region
        $region33: #{shopee_forward.3} parent=11 // pred_check
          %p319 = pneg %p183
        $region34: #{shopee_forward.3} parent=11 // pred_check_branch
          %321 = sbr.rel (%p319) target = $region36
        $region35: #{shopee_forward.3} parent=11 // pred_region
          _
        $region36: #{shopee_forward.3} parent=11 // pred_fallthru
          _
      $region12: #{shopee_forward.3} parent=5 // pred_fallthru
        _
      %p322 = scmp.lt.s32.totalorder %s17, 2
      // Predicated region
      $region37: #{shopee_forward.3} parent=5 // pred_check
        %p323 = pneg %p322
      $region38: #{shopee_forward.3} parent=5 // pred_check_branch
        %325 = sbr.rel (%p323) target = $region40
      $region39: #{shopee_forward.3} parent=5 // pred_region
        // Predicated region
        $region41: #{shopee_forward.3} parent=39 // pred_check
          %p326 = pneg %p156
        $region42: #{shopee_forward.3} parent=39 // pred_check_branch
          %328 = sbr.rel (%p326) target = $region44
        $region43: #{shopee_forward.3} parent=39 // pred_region
          %s329 = sand.u32 %s146, 1
          %s330 = sand.u32 %s146, 1
          %s331 = smul.addr %s330, 128
          %s332 = scalar_lea.vmem [#allocation6], %s331
          %s333 = sadd.s32 %s24, %s25
          %s334 = smul.u32 2, %s333
          %s335 = smul.addr %s334, 4
          %s336 = scalar_lea.vmem %s5, %s335
          // Predicated region
          $region45: #{shopee_forward.3} parent=43 // pred_check
            _
          $region46: #{shopee_forward.3} parent=43 // pred_check_branch
            %338 = sbr.rel (0) target = $region48
          $region47: #{shopee_forward.3} parent=43 // pred_region
            // Predicated region
            $region49: #{shopee_forward.3} parent=47 // pred_check
              _
            $region50: #{shopee_forward.3} parent=47 // pred_check_branch
              %340 = sbr.rel (0) target = $region52
            $region51: #{shopee_forward.3} parent=47 // pred_region
              // Predicated region
              $region64: #{shopee_forward.3} parent=51 // pred_check
                _
              $region65: #{shopee_forward.3} parent=51 // pred_check_branch
                %385 = sbr.rel (0) target = $region67
              $region66: #{shopee_forward.3} parent=51 // pred_region
                loop: start=0, step=1, limit=1
                $region68: #{shopee_forward.3} parent=66 // loop_pre_header
                  _
                $region69: #{shopee_forward.3} parent=66 // loop_header
                  %s387 = sphi 0, %s391
                  %p388 = scmp.ge.s32.totalorder %s387, 1
                  %s392 = sphi %s336, %s336
                  %s393 = sphi %s332, %s332
                $region70: #{shopee_forward.3} parent=66 // loop_header_branch
                  %390 = sbr.rel (%p388) target = $region74
                $region71: #{shopee_forward.3} parent=66 // loop_body
                  %v394 = vld [vmem:[%s392] sm:$0xff]
                  %395 = vst [vmem:[%s393] sm:$0xff] %v394
                  %v396 = vld [vmem:[%s392 + $0x10] sm:$0xff]
                  %397 = vst [vmem:[%s393 + $0x8] sm:$0xff] %v396
                  %v398 = vld [vmem:[%s392 + $0x20] sm:$0xff]
                  %399 = vst [vmem:[%s393 + $0x10] sm:$0xff] %v398
                  %v400 = vld [vmem:[%s392 + $0x30] sm:$0xff]
                  %401 = vst [vmem:[%s393 + $0x18] sm:$0xff] %v400
                  %v402 = vld [vmem:[%s392 + $0x40] sm:$0xff]
                  %403 = vst [vmem:[%s393 + $0x20] sm:$0xff] %v402
                  %v404 = vld [vmem:[%s392 + $0x50] sm:$0xff]
                  %405 = vst [vmem:[%s393 + $0x28] sm:$0xff] %v404
                  %v406 = vld [vmem:[%s392 + $0x60] sm:$0xff]
                  %407 = vst [vmem:[%s393 + $0x30] sm:$0xff] %v406
                  %v408 = vld [vmem:[%s392 + $0x70] sm:$0xff]
                  %409 = vst [vmem:[%s393 + $0x38] sm:$0xff] %v408
                  %v410 = vld [vmem:[%s392 + $0x80] sm:$0xff]
                  %411 = vst [vmem:[%s393 + $0x40] sm:$0xff] %v410
                  %v412 = vld [vmem:[%s392 + $0x90] sm:$0xff]
                  %413 = vst [vmem:[%s393 + $0x48] sm:$0xff] %v412
                  %v414 = vld [vmem:[%s392 + $0xa0] sm:$0xff]
                  %415 = vst [vmem:[%s393 + $0x50] sm:$0xff] %v414
                  %v416 = vld [vmem:[%s392 + $0xb0] sm:$0xff]
                  %417 = vst [vmem:[%s393 + $0x58] sm:$0xff] %v416
                  %v418 = vld [vmem:[%s392 + $0xc0] sm:$0xff]
                  %419 = vst [vmem:[%s393 + $0x60] sm:$0xff] %v418
                  %v420 = vld [vmem:[%s392 + $0xd0] sm:$0xff]
                  %421 = vst [vmem:[%s393 + $0x68] sm:$0xff] %v420
                  %v422 = vld [vmem:[%s392 + $0xe0] sm:$0xff]
                  %423 = vst [vmem:[%s393 + $0x70] sm:$0xff] %v422
                  %v424 = vld [vmem:[%s392 + $0xf0] sm:$0xff]
                  %425 = vst [vmem:[%s393 + $0x78] sm:$0xff] %v424
                $region72: #{shopee_forward.3} parent=66 // loop_footer
                  %s391 = sadd.s32 1, %s387
                $region73: #{shopee_forward.3} parent=66 // loop_footer_branch
                  %386 = sbr.rel target = $region69
                $region74: #{shopee_forward.3} parent=66 // loop_exit
                  _
              $region67: #{shopee_forward.3} parent=51 // pred_fallthru
                _
              // Predicated region
              $region75: #{shopee_forward.3} parent=51 // pred_check
                _
              $region76: #{shopee_forward.3} parent=51 // pred_check_branch
                %427 = sbr.rel target = $region78
              $region77: #{shopee_forward.3} parent=51 // pred_region
                _
              $region78: #{shopee_forward.3} parent=51 // pred_fallthru
                _
            $region52: #{shopee_forward.3} parent=47 // pred_fallthru
              _
            // Predicated region
            $region53: #{shopee_forward.3} parent=47 // pred_check
              _
            $region54: #{shopee_forward.3} parent=47 // pred_check_branch
              %342 = sbr.rel target = $region56
            $region55: #{shopee_forward.3} parent=47 // pred_region
              loop: start=0, step=1, limit=1
              $region57: #{shopee_forward.3} parent=55 // loop_pre_header
                _
              $region58: #{shopee_forward.3} parent=55 // loop_header
                %s345 = sphi 0, %s349
                %p346 = scmp.ge.s32.totalorder %s345, 1
                %s350 = sphi %s336, %s336
                %s351 = sphi %s332, %s332
              $region59: #{shopee_forward.3} parent=55 // loop_header_branch
                %348 = sbr.rel (%p346) target = $region63
              $region60: #{shopee_forward.3} parent=55 // loop_body
                %v352 = vld [vmem:[%s350] sm:$0xff]
                %353 = vst [vmem:[%s351] sm:$0xff] %v352
                %v354 = vld [vmem:[%s350 + $0x10] sm:$0xff]
                %355 = vst [vmem:[%s351 + $0x8] sm:$0xff] %v354
                %v356 = vld [vmem:[%s350 + $0x20] sm:$0xff]
                %357 = vst [vmem:[%s351 + $0x10] sm:$0xff] %v356
                %v358 = vld [vmem:[%s350 + $0x30] sm:$0xff]
                %359 = vst [vmem:[%s351 + $0x18] sm:$0xff] %v358
                %v360 = vld [vmem:[%s350 + $0x40] sm:$0xff]
                %361 = vst [vmem:[%s351 + $0x20] sm:$0xff] %v360
                %v362 = vld [vmem:[%s350 + $0x50] sm:$0xff]
                %363 = vst [vmem:[%s351 + $0x28] sm:$0xff] %v362
                %v364 = vld [vmem:[%s350 + $0x60] sm:$0xff]
                %365 = vst [vmem:[%s351 + $0x30] sm:$0xff] %v364
                %v366 = vld [vmem:[%s350 + $0x70] sm:$0xff]
                %367 = vst [vmem:[%s351 + $0x38] sm:$0xff] %v366
                %v368 = vld [vmem:[%s350 + $0x80] sm:$0xff]
                %369 = vst [vmem:[%s351 + $0x40] sm:$0xff] %v368
                %v370 = vld [vmem:[%s350 + $0x90] sm:$0xff]
                %371 = vst [vmem:[%s351 + $0x48] sm:$0xff] %v370
                %v372 = vld [vmem:[%s350 + $0xa0] sm:$0xff]
                %373 = vst [vmem:[%s351 + $0x50] sm:$0xff] %v372
                %v374 = vld [vmem:[%s350 + $0xb0] sm:$0xff]
                %375 = vst [vmem:[%s351 + $0x58] sm:$0xff] %v374
                %v376 = vld [vmem:[%s350 + $0xc0] sm:$0xff]
                %377 = vst [vmem:[%s351 + $0x60] sm:$0xff] %v376
                %v378 = vld [vmem:[%s350 + $0xd0] sm:$0xff]
                %379 = vst [vmem:[%s351 + $0x68] sm:$0xff] %v378
                %v380 = vld [vmem:[%s350 + $0xe0] sm:$0xff]
                %381 = vst [vmem:[%s351 + $0x70] sm:$0xff] %v380
                %v382 = vld [vmem:[%s350 + $0xf0] sm:$0xff]
                %383 = vst [vmem:[%s351 + $0x78] sm:$0xff] %v382
              $region61: #{shopee_forward.3} parent=55 // loop_footer
                %s349 = sadd.s32 1, %s345
              $region62: #{shopee_forward.3} parent=55 // loop_footer_branch
                %344 = sbr.rel target = $region58
              $region63: #{shopee_forward.3} parent=55 // loop_exit
                _
            $region56: #{shopee_forward.3} parent=47 // pred_fallthru
              _
          $region48: #{shopee_forward.3} parent=43 // pred_fallthru
            _
          %428 = vnop
        $region44: #{shopee_forward.3} parent=39 // pred_fallthru
          _
      $region40: #{shopee_forward.3} parent=5 // pred_fallthru
        _
      %p429 = scmp.le.s32.totalorder 1, %s17
      %p430 = scmp.lt.s32.totalorder %s17, 3
      %p431 = pnand %p429, %p430
      %p432 = pneg %p431
      // Predicated region
      $region79: #{shopee_forward.3} parent=5 // pred_check
        _
      $region80: #{shopee_forward.3} parent=5 // pred_check_branch
        %434 = sbr.rel (%p431) target = $region82
      $region81: #{shopee_forward.3} parent=5 // pred_region
        %s435 = ssub.s32 %s17, 1
        %s436 = sand.u32 %s149, 1
        %s437 = sand.u32 %s149, 1
        %s438 = smul.addr %s437, 128
        %s439 = scalar_lea.vmem [#allocation6], %s438
        // Predicated region
        $region83: #{shopee_forward.3} parent=81 // pred_check
          %p440 = pneg %p162
        $region84: #{shopee_forward.3} parent=81 // pred_check_branch
          %442 = sbr.rel (%p440) target = $region86
        $region85: #{shopee_forward.3} parent=81 // pred_region
          _
        $region86: #{shopee_forward.3} parent=81 // pred_fallthru
          _
        %p443 = pneg %p50
        %p444 = pneg %p47
        %p445 = pneg %p71
        %p446 = pneg %p68
        %p447 = pneg %p92
        %p448 = pneg %p89
        %p449 = pneg %p113
        %p450 = pneg %p110
        %p451 = pneg %p134
        %p452 = pneg %p131
        %s453 = sand.u32 %s149, 1
        %s454 = sand.u32 %s149, 1
        %s455 = smul.addr %s454, 128
        %s456 = scalar_lea.vmem [#allocation6], %s455
        %p457 = pneg %p162
        %p458 = pneg %p159
        %p459 = pneg %p183
        %p460 = pneg %p180
        %p461 = pneg %p211
        %p462 = pneg %p208
        %s463 = sadd.s32 %s26, %s27
        %s464 = smul.u32 2, %s463
        %p465 = scmp.lt.s32.totalorder %s464, 3
        %s466 = scalar_select %p465, %s464, 3
        %s467 = smul.addr %s466, 8
        %s468 = scalar_lea.vmem %s7, %s467
        %p469 = pneg %p237
        %p470 = pneg %p234
        %p471 = scmp.lt.s32.totalorder %s26, 1
        %s472 = scalar_select %p471, %s26, 1
        %s473 = smul.addr %s472, 8
        %s474 = scalar_lea.vmem %s8, %s473
        %p475 = pneg %p263
        %p476 = pneg %p260
        %p477 = scmp.lt.s32.totalorder %s26, 1
        %s478 = scalar_select %p477, %s26, 1
        %s479 = smul.addr %s478, 8
        %s480 = scalar_lea.vmem %s9, %s479
        %p481 = pneg %p289
        %p482 = pneg %p286
        %p483 = scmp.lt.s32.totalorder %s26, 1
        %s484 = scalar_select %p483, %s26, 1
        %s485 = smul.addr %s484, 8
        %s486 = scalar_lea.vmem %s10, %s485
        %s487 = sadd.s32 %s26, %s27
        %s488 = smul.u32 2, %s487
        %s489 = sadd.s32 %s26, %s27
        %s490 = smul.u32 2, %s489
        %p491 = scmp.lt.s32.totalorder %s490, 3
        %s492 = scalar_select %p491, %s490, 3
        %s493 = smul.addr %s492, 8
        %s494 = scalar_lea.vmem %s7, %s493
        %s495 = sadd.s32 %s26, %s27
        %s496 = smul.u32 2, %s495
        %p497 = scmp.lt.s32.totalorder %s26, 1
        %s498 = scalar_select %p497, %s26, 1
        %s499 = smul.addr %s498, 8
        %s500 = scalar_lea.vmem %s8, %s499
        %p501 = scmp.lt.s32.totalorder %s26, 1
        %s502 = scalar_select %p501, %s26, 1
        %s503 = smul.addr %s502, 8
        %s504 = scalar_lea.vmem %s9, %s503
        %p505 = scmp.lt.s32.totalorder %s26, 1
        %s506 = scalar_select %p505, %s26, 1
        %s507 = smul.addr %s506, 8
        %s508 = scalar_lea.vmem %s10, %s507
        %p510 = scmp.eq.s32.totalorder %s27, 0
        // Predicated region
        $region87: #{shopee_forward.3} parent=81 // pred_check
          %p511 = pneg %p510
        $region88: #{shopee_forward.3} parent=81 // pred_check_branch
          %513 = sbr.rel (%p511) target = $region90
        $region89: #{shopee_forward.3} parent=81 // pred_region
          %v514 = vld [vmem:[%s0] sm:$0xf]
          %v515 = vld [vmem:[%s1] sm:$0xf]
          %v516 = vld [vmem:[%s1 + $0x4] sm:$0xf]
          %v517 = vld [vmem:[%s1 + $0x8] sm:$0xf]
          %v518 = vld [vmem:[%s1 + $0xc] sm:$0xf]
          %v519 = vld [vmem:[%s1 + $0x10] sm:$0xf]
          %v520 = vld [vmem:[%s1 + $0x14] sm:$0xf]
          %v521 = vld [vmem:[%s1 + $0x18] sm:$0xf]
          %v522 = vld [vmem:[%s1 + $0x1c] sm:$0xf]
          %v523 = vld [vmem:[%s1 + $0x20] sm:$0xf]
          %v524 = vld [vmem:[%s1 + $0x24] sm:$0xf]
          %v525 = vld [vmem:[%s1 + $0x28] sm:$0xf]
          %v526 = vld [vmem:[%s1 + $0x2c] sm:$0xf]
          %v527 = vld [vmem:[%s1 + $0x30] sm:$0xf]
          %v528 = vld [vmem:[%s1 + $0x34] sm:$0xf]
          %v529 = vld [vmem:[%s1 + $0x38] sm:$0xf]
          %v530 = vld [vmem:[%s1 + $0x3c] sm:$0xf]
          %v531 = vld [vmem:[%s2] sm:$0x1]
          %v533 = vlaneseq
          %v534 = vshrl.u32 %v533, 7
          %v535 = vsub.s32 0, %v534
          %v536 = vrot.slane %v531, %v535
          %v554 = vunpack.c.l.b16 %v515
          %v555 = vunpack.c.l.b16 %v516
          %v556 = vunpack.c.l.b16 %v517
          %v557 = vunpack.c.l.b16 %v518
          %v558 = vunpack.c.l.b16 %v519
          %v559 = vunpack.c.l.b16 %v520
          %v560 = vunpack.c.l.b16 %v521
          %v561 = vunpack.c.l.b16 %v522
          %v562 = vunpack.c.l.b16 %v523
          %v563 = vunpack.c.l.b16 %v524
          %v564 = vunpack.c.l.b16 %v525
          %v565 = vunpack.c.l.b16 %v526
          %v566 = vunpack.c.l.b16 %v527
          %v567 = vunpack.c.l.b16 %v528
          %v568 = vunpack.c.l.b16 %v529
          %v569 = vunpack.c.l.b16 %v530
          %v570 = vpack.c.b16 %v555, %v554
          %v571 = vpack.c.b16 %v557, %v556
          %v572 = vpack.c.b16 %v559, %v558
          %v573 = vpack.c.b16 %v561, %v560
          %v574 = vpack.c.b16 %v563, %v562
          %v575 = vpack.c.b16 %v565, %v564
          %v576 = vpack.c.b16 %v567, %v566
          %v577 = vpack.c.b16 %v569, %v568
          %586 = vmatprep.subr.bf16.mxu0 0
          %587 = vmatpush1.bf16.msra.mxu0 %v570
          %588 = vmatprep.subr.bf16.mxu0 0
          %589 = vmatpush1.bf16.msra.mxu0 %v571
          %590 = vmatprep.subr.bf16.mxu0 0
          %591 = vmatpush1.bf16.msra.mxu0 %v572
          %592 = vmatprep.subr.bf16.mxu0 0
          %593 = vmatpush1.bf16.msra.mxu0 %v573
          %594 = vmatprep.subr.bf16.mxu0 0
          %595 = vmatpush1.bf16.msra.mxu0 %v574
          %596 = vmatprep.subr.bf16.mxu0 0
          %597 = vmatpush1.bf16.msra.mxu0 %v575
          %598 = vmatprep.subr.bf16.mxu0 0
          %599 = vmatpush1.bf16.msra.mxu0 %v576
          %600 = vmatprep.subr.bf16.mxu0 0
          %601 = vmatpush1.bf16.msra.mxu0 %v577
          %602 = vmatprep.subr.bf16.mxu0 0
          %603 = vmatpush1.bf16.msra.mxu0 0
          %604 = vmatprep.subr.bf16.mxu0 0
          %605 = vmatpush1.bf16.msra.mxu0 0
          %606 = vmatprep.subr.bf16.mxu0 0
          %607 = vmatpush1.bf16.msra.mxu0 0
          %608 = vmatprep.subr.bf16.mxu0 0
          %609 = vmatpush1.bf16.msra.mxu0 0
          %610 = vmatprep.subr.bf16.mxu0 0
          %611 = vmatpush1.bf16.msra.mxu0 0
          %612 = vmatprep.subr.bf16.mxu0 0
          %613 = vmatpush1.bf16.msra.mxu0 0
          %614 = vmatprep.subr.bf16.mxu0 0
          %615 = vmatpush1.bf16.msra.mxu0 0
          %616 = vmatprep.subr.bf16.mxu0 0
          %617 = vmatpush1.bf16.msra.mxu0 0
          %618 = vmatprep.mubr.bf16.mxu0 0
          %619 = vmatmul.mubr.bf16.gmra.mrb[0].mxu0 %v514
          %v620 = vpop.f32.mrb[0].mxu0
          %v621 = vadd.f32 %v536, %v620
          %v622 = vpop.f32.mrb[0].mxu0
          %v623 = vpop.f32.mrb[0].mxu0
          %v624 = vpop.f32.mrb[0].mxu0
          %625 = vdwg.mxu0
          %v626 = vlaneseq
          %v627 = vshrl.u32 %v626, 7
          %vm628 = vcmp.lt.s32.totalorder %v627, 2
          %v629 = vsel %vm628, 1, 0
          %v630 = vcvt.s32.f32 %v629
          %v631 = vmul.f32 %v621, %v630
          %v632 = vrot.slane %v631, 4
          %v633 = vadd.f32 %v631, %v632
          %v634 = vrot.slane %v633, 2
          %v635 = vadd.f32 %v633, %v634
          %v636 = vrot.slane %v635, 1
          %v637 = vadd.f32 %v635, %v636
          %v638 = vmul.f32 %v637, 0.5
          %v639 = vsub.f32 %v621, %v638
          %v640 = vmul.f32 %v639, %v630
          %v641 = vmul.f32 %v640, %v640
          %v642 = vrot.slane %v641, 4
          %v643 = vadd.f32 %v641, %v642
          %v644 = vrot.slane %v643, 2
          %v645 = vadd.f32 %v643, %v644
          %v646 = vrot.slane %v645, 1
          %v647 = vadd.f32 %v645, %v646
          %v648 = vmul.f32 %v647, 0.5
          %v649 = vld [vmem:[%s3] sm:$0x1]
          %v651 = vlaneseq
          %v652 = vshrl.u32 %v651, 7
          %v653 = vsub.s32 0, %v652
          %v654 = vrot.slane %v649, %v653
          %v656 = vmul.f32 %v654, %v639
          %v657 = vadd.f32 %v648, 1e-05
          %v658 = vrsqrt.pop %v657
          %v659 = vmul.f32 %v656, %v658
          %v660 = vld [vmem:[%s4] sm:$0x1]
          %v662 = vlaneseq
          %v663 = vshrl.u32 %v662, 7
          %v664 = vsub.s32 0, %v663
          %v665 = vrot.slane %v660, %v664
          %v667 = vadd.f32 %v659, %v665
          %v668 = vmul.f32 %v667, %v667
          %669 = vadd.xlane.f32.xlu0 %v668
          %v670 = vpop.xlane.xlu0 %669
          %v671 = vmax.f32 %v670, 1e-24
          %v672 = vrsqrt.pop %v671
          %v673 = vmul.f32 %v667, %v672
          %v674 = vpack.c.bf16 %v673, %v673
          %675 = vst [vmem:[#allocation2] sm:$0xf] %v674
          %vm676 = vcmask 7168
          %677 = vst.msk [vmem:[#allocation3] sm:$0xff] %vm676, -1e+30
          %678 = vst.msk [vmem:[#allocation4] sm:$0xff] %vm676, 0.0
          %679 = vst.msk [vmem:[#allocation5] sm:$0xff] %vm676, 0.0
        $region90: #{shopee_forward.3} parent=81 // pred_fallthru
          _
        %v680 = vld [vmem:[#allocation2] sm:$0xf]
        %v681 = vld [vmem:[%s439] sm:$0xff]
        %v682 = vld [vmem:[%s439 + $0x8] sm:$0xff]
        %v683 = vld [vmem:[%s439 + $0x10] sm:$0xff]
        %v684 = vld [vmem:[%s439 + $0x18] sm:$0xff]
        %v685 = vld [vmem:[%s439 + $0x20] sm:$0xff]
        %v686 = vld [vmem:[%s439 + $0x28] sm:$0xff]
        %v687 = vld [vmem:[%s439 + $0x30] sm:$0xff]
        %v688 = vld [vmem:[%s439 + $0x38] sm:$0xff]
        %v689 = vld [vmem:[%s439 + $0x40] sm:$0xff]
        %v690 = vld [vmem:[%s439 + $0x48] sm:$0xff]
        %v691 = vld [vmem:[%s439 + $0x50] sm:$0xff]
        %v692 = vld [vmem:[%s439 + $0x58] sm:$0xff]
        %v693 = vld [vmem:[%s439 + $0x60] sm:$0xff]
        %v694 = vld [vmem:[%s439 + $0x68] sm:$0xff]
        %v695 = vld [vmem:[%s439 + $0x70] sm:$0xff]
        %v696 = vld [vmem:[%s439 + $0x78] sm:$0xff]
        %v713 = vunpack.c.l.b16 %v681
        %v714 = vunpack.c.h.b16 %v681
        %v715 = vunpack.c.l.b16 %v682
        %v716 = vunpack.c.h.b16 %v682
        %v717 = vunpack.c.l.b16 %v683
        %v718 = vunpack.c.h.b16 %v683
        %v719 = vunpack.c.l.b16 %v684
        %v720 = vunpack.c.h.b16 %v684
        %v721 = vunpack.c.l.b16 %v685
        %v722 = vunpack.c.h.b16 %v685
        %v723 = vunpack.c.l.b16 %v686
        %v724 = vunpack.c.h.b16 %v686
        %v725 = vunpack.c.l.b16 %v687
        %v726 = vunpack.c.h.b16 %v687
        %v727 = vunpack.c.l.b16 %v688
        %v728 = vunpack.c.h.b16 %v688
        %v729 = vunpack.c.l.b16 %v689
        %v730 = vunpack.c.h.b16 %v689
        %v731 = vunpack.c.l.b16 %v690
        %v732 = vunpack.c.h.b16 %v690
        %v733 = vunpack.c.l.b16 %v691
        %v734 = vunpack.c.h.b16 %v691
        %v735 = vunpack.c.l.b16 %v692
        %v736 = vunpack.c.h.b16 %v692
        %v737 = vunpack.c.l.b16 %v693
        %v738 = vunpack.c.h.b16 %v693
        %v739 = vunpack.c.l.b16 %v694
        %v740 = vunpack.c.h.b16 %v694
        %v741 = vunpack.c.l.b16 %v695
        %v742 = vunpack.c.h.b16 %v695
        %v743 = vunpack.c.l.b16 %v696
        %v744 = vunpack.c.h.b16 %v696
        %v745 = vpack.c.b16 %v715, %v713
        %v746 = vpack.c.b16 %v716, %v714
        %v747 = vpack.c.b16 %v719, %v717
        %v748 = vpack.c.b16 %v720, %v718
        %v749 = vpack.c.b16 %v723, %v721
        %v750 = vpack.c.b16 %v724, %v722
        %v751 = vpack.c.b16 %v727, %v725
        %v752 = vpack.c.b16 %v728, %v726
        %v753 = vpack.c.b16 %v731, %v729
        %v754 = vpack.c.b16 %v732, %v730
        %v755 = vpack.c.b16 %v735, %v733
        %v756 = vpack.c.b16 %v736, %v734
        %v757 = vpack.c.b16 %v739, %v737
        %v758 = vpack.c.b16 %v740, %v738
        %v759 = vpack.c.b16 %v743, %v741
        %v760 = vpack.c.b16 %v744, %v742
        %777 = vmatprep.subr.bf16.mxu0 %v746
        %778 = vmatpush1.bf16.msra.mxu0 %v745
        %779 = vmatprep.subr.bf16.mxu0 %v748
        %780 = vmatpush1.bf16.msra.mxu0 %v747
        %781 = vmatprep.subr.bf16.mxu0 %v750
        %782 = vmatpush1.bf16.msra.mxu0 %v749
        %783 = vmatprep.subr.bf16.mxu0 %v752
        %784 = vmatpush1.bf16.msra.mxu0 %v751
        %785 = vmatprep.subr.bf16.mxu0 %v754
        %786 = vmatpush1.bf16.msra.mxu0 %v753
        %787 = vmatprep.subr.bf16.mxu0 %v756
        %788 = vmatpush1.bf16.msra.mxu0 %v755
        %789 = vmatprep.subr.bf16.mxu0 %v758
        %790 = vmatpush1.bf16.msra.mxu0 %v757
        %791 = vmatprep.subr.bf16.mxu0 %v760
        %792 = vmatpush1.bf16.msra.mxu0 %v759
        %793 = vmatprep.subr.bf16.mxu0 0
        %794 = vmatpush1.bf16.msra.mxu0 0
        %795 = vmatprep.subr.bf16.mxu0 0
        %796 = vmatpush1.bf16.msra.mxu0 0
        %797 = vmatprep.subr.bf16.mxu0 0
        %798 = vmatpush1.bf16.msra.mxu0 0
        %799 = vmatprep.subr.bf16.mxu0 0
        %800 = vmatpush1.bf16.msra.mxu0 0
        %801 = vmatprep.subr.bf16.mxu0 0
        %802 = vmatpush1.bf16.msra.mxu0 0
        %803 = vmatprep.subr.bf16.mxu0 0
        %804 = vmatpush1.bf16.msra.mxu0 0
        %805 = vmatprep.subr.bf16.mxu0 0
        %806 = vmatpush1.bf16.msra.mxu0 0
        %807 = vmatprep.subr.bf16.mxu0 0
        %808 = vmatpush1.bf16.msra.mxu0 0
        %809 = vmatprep.mubr.bf16.mxu0 0
        %810 = vmatmul.mubr.bf16.gmra.mrb[0].mxu0 %v680
        %v811 = vpop.f32.mrb[0].mxu0
        %v812 = vadd.f32 0.0, %v811
        %v813 = vpop.f32.mrb[0].mxu0
        %v814 = vadd.f32 0.0, %v813
        %v815 = vpop.f32.mrb[0].mxu0
        %v816 = vpop.f32.mrb[0].mxu0
        %817 = vdwg.mxu0
        %v818 = vmul.f32 %v812, %v812
        %v819 = vmul.f32 %v814, %v814
        %v820 = vsub.f32 1.0, %v818
        %v821 = vsub.f32 1.0, %v819
        %v822 = vmax.f32 %v820, 0.0
        %v823 = vmax.f32 %v821, 0.0
        %v824 = vrsqrt.pop %v822
        %v825 = vmul.f32 %v822, %v824
        %vm826 = vcmp.eq.f32.partialorder %v822, inf
        %v827 = vsel %vm826, %v822, %v825
        %vm828 = vcmp.eq.f32.partialorder %v822, 0.0
        %v829 = vand.u32 %v822, 2147483648
        %v830 = vsel %vm828, %v829, %v827
        %v831 = vrsqrt.pop %v823
        %v832 = vmul.f32 %v823, %v831
        %vm833 = vcmp.eq.f32.partialorder %v823, inf
        %v834 = vsel %vm833, %v823, %v832
        %vm835 = vcmp.eq.f32.partialorder %v823, 0.0
        %v836 = vand.u32 %v823, 2147483648
        %v837 = vsel %vm835, %v836, %v834
        %v838 = vmul.f32 %v812, 0.87758255
        %v839 = vmul.f32 %v814, 0.87758255
        %v840 = vmul.f32 %v830, 0.47942555
        %v841 = vmul.f32 %v837, 0.47942555
        %v842 = vsub.f32 %v838, %v840
        %v843 = vsub.f32 %v839, %v841
        %vm844 = vcmp.gt.f32.partialorder %v812, -0.87758255
        %vm845 = vcmp.gt.f32.partialorder %v814, -0.87758255
        %v846 = vsub.f32 %v812, 0.23971277
        %v847 = vsub.f32 %v814, 0.23971277
        %v848 = vsel %vm844, %v842, %v846
        %v849 = vsel %vm845, %v843, %v847
        %s850 = sadd.s32 %s26, %s27
        %v851 = vlaneseq
        %v852 = vand.u32 %v851, 127
        %v853 = vadd.s32 %v852, 128
        %s854 = smul.u32 %s850, 256
        %v855 = vstv %s854
        %v856 = vadd.s32 %v852, %v855
        %v857 = vadd.s32 %v853, %v855
        %v858 = vld [vmem:[%s6] sm:$0xff]
        %859 = vset.pattern.permute.xlu0 0
        %860 = vperm.xlu0 %859, %v858
        %v861 = vpop.permute.xlu0 %860
        %vm862 = vcmp.eq.s32.totalorder %v856, %v861
        %vm863 = vcmp.eq.s32.totalorder %v857, %v861
        %v864 = vsel %vm862, 1, 0
        %v865 = vsel %vm863, 1, 0
        %v866 = vcvt.s32.f32 %v864
        %v867 = vcvt.s32.f32 %v865
        %v868 = vmul.f32 %v866, %v848
        %v869 = vmul.f32 %v867, %v849
        %v870 = vsub.f32 1.0, %v866
        %v871 = vsub.f32 1.0, %v867
        %v872 = vmul.f32 %v870, %v812
        %v873 = vmul.f32 %v871, %v814
        %v874 = vadd.f32 %v868, %v872
        %v875 = vadd.f32 %v869, %v873
        %v876 = vmul.f32 %v874, 30.0
        %v877 = vmul.f32 %v875, 30.0
        %878 = vst [vmem:[%s494] sm:$0xff] %v876
        %879 = vst [vmem:[%s494 + $0x8] sm:$0xff] %v877
        %vm880 = vcmp.lt.s32.totalorder %v856, 200
        %vm881 = vcmp.lt.s32.totalorder %v857, 200
        %v882 = vsel %vm880, %v876, -1e+30
        %v883 = vsel %vm881, %v877, -1e+30
        %v884 = vld [vmem:[#allocation3] sm:$0xff]
        %v885 = vmax.f32 %v882, %v883
        %886 = vmax.xlane.f32.xlu0 %v885
        %v887 = vpop.xlane.xlu0 %886
        %v888 = vmax.f32 %v884, %v887
        %v889 = vsub.f32 %v884, %v888
        %v890 = vmul.f32 %v889, 1.442695
        %v891 = vpow.pop %v890
        %v892 = vld [vmem:[#allocation4] sm:$0xff]
        %v893 = vmul.f32 %v892, %v891
        %895 = vset.pattern.permute.xlu0 0
        %896 = vperm.xlu0 %895, %v888
        %v897 = vpop.permute.xlu0 %896
        %v899 = vsub.f32 %v882, %v897
        %v900 = vsub.f32 %v883, %v897
        %v901 = vmul.f32 %v899, 1.442695
        %v902 = vpow.pop %v901
        %v903 = vmul.f32 %v900, 1.442695
        %v904 = vpow.pop %v903
        %v905 = vadd.f32 %v902, %v904
        %906 = vadd.xlane.f32.xlu0 %v905
        %v907 = vpop.xlane.xlu0 %906
        %v908 = vadd.f32 %v893, %v907
        %v909 = vld [vmem:[#allocation5] sm:$0xff]
        %v910 = vmul.f32 %v866, %v876
        %v911 = vmul.f32 %v867, %v877
        %v912 = vadd.f32 %v910, %v911
        %913 = vadd.xlane.f32.xlu0 %v912
        %v914 = vpop.xlane.xlu0 %913
        %v915 = vadd.f32 %v909, %v914
        %vm916 = vcmask 7168
        %917 = vst.msk [vmem:[#allocation3] sm:$0xff] %vm916, %v888
        %918 = vst.msk [vmem:[#allocation4] sm:$0xff] %vm916, %v908
        %919 = vst.msk [vmem:[#allocation5] sm:$0xff] %vm916, %v915
        %920 = vst.msk [vmem:[%s500] sm:$0xff] %vm916, %v888
        %921 = vst.msk [vmem:[%s504] sm:$0xff] %vm916, %v908
        %922 = vst.msk [vmem:[%s508] sm:$0xff] %vm916, %v915
        %s923 = sadd.s32 %s26, %s27
        %s924 = smul.u32 2, %s923
        %p925 = scmp.lt.s32.totalorder %s924, 3
        %s926 = scalar_select %p925, %s924, 3
        %s927 = smul.addr %s926, 8
        %s928 = scalar_lea.vmem %s7, %s927
        %p929 = scmp.lt.s32.totalorder %s26, 1
        %s930 = scalar_select %p929, %s26, 1
        %s931 = smul.addr %s930, 8
        %s932 = scalar_lea.vmem %s8, %s931
        %p933 = scmp.lt.s32.totalorder %s26, 1
        %s934 = scalar_select %p933, %s26, 1
        %s935 = smul.addr %s934, 8
        %s936 = scalar_lea.vmem %s9, %s935
        %p937 = scmp.lt.s32.totalorder %s26, 1
        %s938 = scalar_select %p937, %s26, 1
        %s939 = smul.addr %s938, 8
        %s940 = scalar_lea.vmem %s10, %s939
        // Predicated region
        $region91: #{shopee_forward.3} parent=81 // pred_check
          %p941 = pneg %p208
        $region92: #{shopee_forward.3} parent=81 // pred_check_branch
          %943 = sbr.rel (%p941) target = $region94
        $region93: #{shopee_forward.3} parent=81 // pred_region
          %s944 = sadd.s32 %s26, %s27
          %s945 = smul.u32 2, %s944
        $region94: #{shopee_forward.3} parent=81 // pred_fallthru
          _
        // Predicated region
        $region95: #{shopee_forward.3} parent=81 // pred_check
          %p946 = pneg %p234
        $region96: #{shopee_forward.3} parent=81 // pred_check_branch
          %948 = sbr.rel (%p946) target = $region98
        $region97: #{shopee_forward.3} parent=81 // pred_region
          _
        $region98: #{shopee_forward.3} parent=81 // pred_fallthru
          _
        // Predicated region
        $region99: #{shopee_forward.3} parent=81 // pred_check
          %p949 = pneg %p260
        $region100: #{shopee_forward.3} parent=81 // pred_check_branch
          %951 = sbr.rel (%p949) target = $region102
        $region101: #{shopee_forward.3} parent=81 // pred_region
          _
        $region102: #{shopee_forward.3} parent=81 // pred_fallthru
          _
        // Predicated region
        $region103: #{shopee_forward.3} parent=81 // pred_check
          %p952 = pneg %p286
        $region104: #{shopee_forward.3} parent=81 // pred_check_branch
          %954 = sbr.rel (%p952) target = $region106
        $region105: #{shopee_forward.3} parent=81 // pred_region
          _
        $region106: #{shopee_forward.3} parent=81 // pred_fallthru
          _
      $region82: #{shopee_forward.3} parent=5 // pred_fallthru
        _
      %p955 = scmp.le.s32.totalorder 2, %s17
      // Predicated region
      $region107: #{shopee_forward.3} parent=5 // pred_check
        %p956 = pneg %p955
      $region108: #{shopee_forward.3} parent=5 // pred_check_branch
        %958 = sbr.rel (%p956) target = $region110
      $region109: #{shopee_forward.3} parent=5 // pred_region
        %s959 = ssub.s32 %s17, 2
        // Predicated region
        $region111: #{shopee_forward.3} parent=109 // pred_check
          %p960 = pneg %p214
        $region112: #{shopee_forward.3} parent=109 // pred_check_branch
          %962 = sbr.rel (%p960) target = $region114
        $region113: #{shopee_forward.3} parent=109 // pred_region
          %s963 = sadd.s32 %s28, %s29
          %s964 = smul.u32 2, %s963
          %p965 = scmp.lt.s32.totalorder %s964, 3
          %s966 = scalar_select %p965, %s964, 3
          %s967 = smul.addr %s966, 8
          %s968 = scalar_lea.vmem %s7, %s967
        $region114: #{shopee_forward.3} parent=109 // pred_fallthru
          _
        // Predicated region
        $region115: #{shopee_forward.3} parent=109 // pred_check
          %p969 = pneg %p240
        $region116: #{shopee_forward.3} parent=109 // pred_check_branch
          %971 = sbr.rel (%p969) target = $region118
        $region117: #{shopee_forward.3} parent=109 // pred_region
          %p972 = scmp.lt.s32.totalorder %s28, 1
          %s973 = scalar_select %p972, %s28, 1
          %s974 = smul.addr %s973, 8
          %s975 = scalar_lea.vmem %s8, %s974
        $region118: #{shopee_forward.3} parent=109 // pred_fallthru
          _
        // Predicated region
        $region119: #{shopee_forward.3} parent=109 // pred_check
          %p976 = pneg %p266
        $region120: #{shopee_forward.3} parent=109 // pred_check_branch
          %978 = sbr.rel (%p976) target = $region122
        $region121: #{shopee_forward.3} parent=109 // pred_region
          %p979 = scmp.lt.s32.totalorder %s28, 1
          %s980 = scalar_select %p979, %s28, 1
          %s981 = smul.addr %s980, 8
          %s982 = scalar_lea.vmem %s9, %s981
        $region122: #{shopee_forward.3} parent=109 // pred_fallthru
          _
        // Predicated region
        $region123: #{shopee_forward.3} parent=109 // pred_check
          %p983 = pneg %p292
        $region124: #{shopee_forward.3} parent=109 // pred_check_branch
          %985 = sbr.rel (%p983) target = $region126
        $region125: #{shopee_forward.3} parent=109 // pred_region
          %p986 = scmp.lt.s32.totalorder %s28, 1
          %s987 = scalar_select %p986, %s28, 1
          %s988 = smul.addr %s987, 8
          %s989 = scalar_lea.vmem %s10, %s988
        $region126: #{shopee_forward.3} parent=109 // pred_fallthru
          _
      $region110: #{shopee_forward.3} parent=5 // pred_fallthru
        _
    $region6: #{shopee_forward.3} parent=1 // loop_footer
      %s21 = sadd.s32 1, %s17
    $region7: #{shopee_forward.3} parent=1 // loop_footer_branch
      %16 = sbr.rel target = $region3
    $region8: #{shopee_forward.3} parent=1 // loop_exit
      _

</llo_original>
